<compile_context>
chip_gen: v7x
topology: tpu7x:2x2x1
jax: 0.10.0
libtpu: 0.0.40
codegen_flags: <defaults>
</compile_context>

<pallas_src>
import functools
import math

import jax
import jax.numpy as jnp
from jax import lax
from jax.experimental import pallas as pl
from jax.experimental.pallas import tpu as pltpu


# ---------------------------------------------------------------------------
# Small helpers
# ---------------------------------------------------------------------------
@functools.lru_cache(maxsize=None)
def _vmem_limit_bytes():
    """Scoped-VMEM budget per generation: ~100 MiB on v5e/v6e (128 MiB
    physical), ~54 MiB on v7x (64 MiB physical)."""
    try:
        cap = pltpu.get_tpu_info().vmem_capacity_bytes
    except Exception:                 # query unavailable -> assume smallest gen
        cap = 64 * 1024 * 1024
    return min(100 * 1024 * 1024, int(cap * 0.85))


def _const_spec(shape, single_buffered):
    """BlockSpec for a grid-invariant operand (weights / biases / LN params).

    With single_buffered=True the block is pipelined with a single VMEM buffer
    (pl.Buffered(1)); double-buffering a constant block is pure VMEM waste."""
    index_map = lambda *_: (0,) * len(shape)
    if single_buffered:
        return pl.BlockSpec(shape, index_map, pipeline_mode=pl.Buffered(1))
    return pl.BlockSpec(shape, index_map)


def _run_with_fallback(build, inputs):
    """build(single_buffered) -> pallas_call callable.

    Try single-buffered grid-invariant operands first; fall back to the
    default double-buffered pipeline if this jax/Mosaic build rejects
    pipeline_mode=pl.Buffered(1)."""
    try:
        return build(True)(*inputs)
    except Exception:
        return build(False)(*inputs)


def _pick_tile(n, target, align):
    """Largest divisor of n that is a multiple of `align` and <= target.

    Falls back to n (single tile) when no aligned divisor exists.
    TODO(synk): cap the fallback for very large awkwardly-sized dims (VMEM)."""
    if n <= target:
        return n
    t = (target // align) * align
    while t >= align:
        if n % t == 0:
            return t
        t -= align
    return n


# ---------------------------------------------------------------------------
# Kernel 1: fused attention sublayer
#   out = y + Wo( MHA( LN(y), kv, kv, mask ) ) + bo
#   kv = LN(y) for self-attention (cross=False), kv = z (raw) for cross-attn.
# One grid step per batch element; the whole (S, D) tile stays in VMEM.
# ---------------------------------------------------------------------------
def _attn_sublayer_kernel(*refs, n_heads, eps, cross, compute_dtype):
    if cross:
        (y_ref, z_ref, m_ref, wq_ref, bq_ref, wkv_ref, bkv_ref,
         wo_ref, bo_ref, g_ref, be_ref, o_ref) = refs
    else:
        (y_ref, m_ref, wqkv_ref, bqkv_ref,
         wo_ref, bo_ref, g_ref, be_ref, o_ref) = refs

    y = y_ref[0].astype(jnp.float32)                 # (Sq, D) residual input
    Sq, D = y.shape
    dk = D // n_heads

    # --- pre-LN in f32 (torch.Tensor.std semantics: unbiased var, eps on std)
    # Exact divide here (feeds everything downstream); approx reciprocal is
    # kept only for the softmax denominator.
    mean = jnp.mean(y, axis=-1, keepdims=True)
    var = jnp.sum((y - mean) ** 2, axis=-1, keepdims=True) / (D - 1)
    yn = g_ref[...] * (y - mean) / (jnp.sqrt(var) + eps) + be_ref[...]
    yn_c = yn.astype(compute_dtype)

    # --- fused projections (bf16 operands, f32 MXU accumulation).  The
    # 1/sqrt(dk) score scale is pre-folded into Wq / bq by the wrapper.
    if cross:
        z_c = z_ref[0].astype(compute_dtype)
        q = jnp.dot(yn_c, wq_ref[...],
                    preferred_element_type=jnp.float32) + bq_ref[...]
        kv = jnp.dot(z_c, wkv_ref[...],
                     preferred_element_type=jnp.float32) + bkv_ref[...]
        k, v = kv[:, :D], kv[:, D:]
    else:
        qkv = jnp.dot(yn_c, wqkv_ref[...],
                      preferred_element_type=jnp.float32) + bqkv_ref[...]
        q, k, v = qkv[:, :D], qkv[:, D:2 * D], qkv[:, 2 * D:]

    Sk = k.shape[0]
    mask_add = jnp.broadcast_to(m_ref[0], (Sq, Sk))  # hoisted out of head loop

    # --- per-head attention (static unrolled loop).  Head outputs are merged
    # once and fed to a single K=D output projection (better MXU fill than
    # n_heads K=dk matmuls).
    # TODO(synk): for dk < 128 the per-head lane slices still relayout; for
    #             long Sq/Sk switch to flash-style (tq, tk) tiling.
    o_heads = []
    for h in range(n_heads):
        hs = slice(h * dk, (h + 1) * dk)
        qh = q[:, hs].astype(compute_dtype)
        kh = k[:, hs].astype(compute_dtype)
        vh = v[:, hs].astype(compute_dtype)
        # contract the last dims directly (no materialized K transpose)
        s = lax.dot_general(qh, kh, (((1,), (1,)), ((), ())),
                            preferred_element_type=jnp.float32)
        s = s + mask_add                              # additive 0 / -1e9 mask
        s_max = jnp.max(s, axis=-1, keepdims=True)
        e = jnp.exp(s - s_max)                        # f32 softmax
        p = e * pl.reciprocal(jnp.sum(e, axis=-1, keepdims=True), approx=True)
        o_heads.append(jnp.dot(p.astype(compute_dtype), vh,
                               preferred_element_type=jnp.float32))
    o_merged = jnp.concatenate(o_heads, axis=-1).astype(compute_dtype)  # (Sq,D)

    # single output projection (K = D) + residual + bias; lane-dense store.
    proj = jnp.dot(o_merged, wo_ref[...], preferred_element_type=jnp.float32)
    o_ref[0] = (y + proj + bo_ref[...]).astype(o_ref.dtype)


def attention_sublayer(attn_p, ln_p, y, kv, addmask, n_heads, *, cross,
                       compute_dtype, out_dtype, eps=1e-6):
    B, Sq, D = y.shape
    Sk = kv.shape[1] if cross else Sq
    cd = compute_dtype
    dk = D // n_heads
    qscale = 1.0 / math.sqrt(dk)

    # fold the 1/sqrt(dk) score scale into the Q projection (free at runtime)
    wq_s = attn_p["wq"] * qscale
    bq_s = attn_p["bq"] * qscale

    if cross:
        weights = [
            wq_s.astype(cd), bq_s.reshape(1, D),
            jnp.concatenate([attn_p["wk"], attn_p["wv"]], axis=1).astype(cd),
            jnp.concatenate([attn_p["bk"], attn_p["bv"]]).reshape(1, 2 * D),
        ]
    else:
        weights = [
            jnp.concatenate([wq_s, attn_p["wk"], attn_p["wv"]],
                            axis=1).astype(cd),
            jnp.concatenate([bq_s, attn_p["bk"], attn_p["bv"]]
                            ).reshape(1, 3 * D),
        ]
    weights += [attn_p["wo"].astype(cd), attn_p["bo"].reshape(1, D),
                ln_p["g"].reshape(1, D), ln_p["b"].reshape(1, D)]

    seq_specs = [pl.BlockSpec((1, Sq, D), lambda b: (b, 0, 0))]
    inputs = [y]
    if cross:
        seq_specs.append(pl.BlockSpec((1, Sk, D), lambda b: (b, 0, 0)))
        inputs.append(kv)
    seq_specs.append(pl.BlockSpec((1, 1, Sk), lambda b: (b, 0, 0)))
    inputs.append(addmask)
    inputs += weights

    kernel = functools.partial(_attn_sublayer_kernel, n_heads=n_heads, eps=eps,
                               cross=cross, compute_dtype=cd)

    def build(single_buffered):
        return pl.pallas_call(
            kernel,
            out_shape=jax.ShapeDtypeStruct((B, Sq, D), out_dtype),
            grid=(B,),
            in_specs=seq_specs + [_const_spec(w.shape, single_buffered)
                                  for w in weights],
            out_specs=pl.BlockSpec((1, Sq, D), lambda b: (b, 0, 0)),
            compiler_params=pltpu.CompilerParams(
                dimension_semantics=("parallel",),
                vmem_limit_bytes=_vmem_limit_bytes()),
        )

    # TODO(synk): add an Sq "parallel" tile axis + flash-style Sk tiling for
    #             long sequences (required to fit v7x's 64 MiB VMEM).
    return _run_with_fallback(build, inputs)


# ---------------------------------------------------------------------------
# Kernel 2: fused FFN sublayer
#   out = x + silu(LN(x) @ W1 + b1) @ W2 + b2
# Grid: (row tiles "parallel", d_ff tiles "arbitrary" reduction).  The
# (tm, d_ff) intermediate never leaves VMEM.
# ---------------------------------------------------------------------------
def _ffn_sublayer_kernel(x_ref, w1_ref, b1_ref, w2_ref, b2_ref, g_ref, be_ref,
                         o_ref, acc_ref, xn_ref, *, eps, compute_dtype):
    f = pl.program_id(1)

    @pl.when(f == 0)
    def _():
        x = x_ref[...].astype(jnp.float32)
        D = x.shape[-1]
        mean = jnp.mean(x, axis=-1, keepdims=True)
        var = jnp.sum((x - mean) ** 2, axis=-1, keepdims=True) / (D - 1)
        xn = g_ref[...] * (x - mean) / (jnp.sqrt(var) + eps) + be_ref[...]
        xn_ref[...] = xn.astype(xn_ref.dtype)
        acc_ref[...] = jnp.zeros_like(acc_ref)

    # this d_ff block: silu(LN(x) @ W1 + b1) @ W2, accumulated in f32
    h = (jnp.dot(xn_ref[...], w1_ref[...], preferred_element_type=jnp.float32)
         + b1_ref[...])
    h = h * jax.nn.sigmoid(h)                         # SiLU in f32
    acc_ref[...] += jnp.dot(h.astype(compute_dtype), w2_ref[...],
                            preferred_element_type=jnp.float32)

    @pl.when(f == pl.num_programs(1) - 1)
    def _():
        o_ref[...] = (x_ref[...].astype(jnp.float32) + acc_ref[...]
                      + b2_ref[...]).astype(o_ref.dtype)


def ffn_sublayer(ff_p, ln_p, x, *, compute_dtype, out_dtype, eps=1e-6):
    B, S, D = x.shape
    M = B * S
    d_ff = ff_p["w1"].shape[1]
    cd = compute_dtype
    x2 = x.reshape(M, D)

    # Row tile ("parallel"): 16-aligned so bf16 operand tiles pack 16
    # sublanes/vreg without padding; larger tm halves per-tile weight
    # re-streaming from HBM.
    tm = _pick_tile(M, 512, 16)
    # d_ff reduction tile ("arbitrary"): sized so double-buffered W1/W2 blocks
    # stay within ~24 MiB.  When d_ff <= tf the FFN weights are fully resident
    # and leave HBM exactly once regardless of M.
    w_bytes_per_col = 2 * D * jnp.dtype(cd).itemsize * 2   # W1+W2, 2 buffers
    tf_target = max(128, min(2048,
                             ((24 * 2 ** 20) // w_bytes_per_col) // 128 * 128))
    tf = _pick_tile(d_ff, tf_target, 128)

    kernel = functools.partial(_ffn_sublayer_kernel, eps=eps, compute_dtype=cd)

    def build(single_buffered):
        return pl.pallas_call(
            kernel,
            out_shape=jax.ShapeDtypeStruct((M, D), out_dtype),
            grid=(M // tm, d_ff // tf),
            in_specs=[
                pl.BlockSpec((tm, D), lambda i, f: (i, 0)),   # x (residual)
                pl.BlockSpec((D, tf), lambda i, f: (0, f)),   # W1 column block
                pl.BlockSpec((1, tf), lambda i, f: (0, f)),   # b1 block
                pl.BlockSpec((tf, D), lambda i, f: (f, 0)),   # W2 row block
                _const_spec((1, D), single_buffered),         # b2
                _const_spec((1, D), single_buffered),         # LN gamma
                _const_spec((1, D), single_buffered),         # LN beta
            ],
            out_specs=pl.BlockSpec((tm, D), lambda i, f: (i, 0)),
            scratch_shapes=[pltpu.VMEM((tm, D), jnp.float32),  # f32 accumulator
                            pltpu.VMEM((tm, D), cd)],          # LN(x) cache
            compiler_params=pltpu.CompilerParams(
                dimension_semantics=("parallel", "arbitrary"),
                vmem_limit_bytes=_vmem_limit_bytes()),
        )

    inputs = (x2, ff_p["w1"].astype(cd), ff_p["b1"].reshape(1, d_ff),
              ff_p["w2"].astype(cd), ff_p["b2"].reshape(1, D),
              ln_p["g"].reshape(1, D), ln_p["b"].reshape(1, D))
    return _run_with_fallback(build, inputs).reshape(B, S, D)


# ---------------------------------------------------------------------------
# Full block forward
# ---------------------------------------------------------------------------
def trans_forward(params, y, z, mask, n_heads, *, compute_dtype=jnp.bfloat16,
                  activation_dtype=jnp.bfloat16):
    """Trans.forward.  Inter-sublayer activations are carried in
    `activation_dtype` (halves HBM traffic of the residual stream); residual /
    LN / softmax math stays f32 inside the kernels; final output in y.dtype."""
    out_dtype = y.dtype
    # Precompute the additive key mask once (0 where attended, -1e9 where not).
    addmask = jnp.where(mask == 0, -1e9, 0.0).astype(jnp.float32)   # (B, 1, S)
    # TODO(synk): same key mask reused for cross-attention (assumes z shares
    #             y's padding pattern), mirroring the reference module.
    y = attention_sublayer(params["self_attn"], params["ln0"], y, None,
                           addmask, n_heads, cross=False,
                           compute_dtype=compute_dtype,
                           out_dtype=activation_dtype)
    y = attention_sublayer(params["cross_attn"], params["ln1"], y,
                           z.astype(compute_dtype), addmask, n_heads,
                           cross=True, compute_dtype=compute_dtype,
                           out_dtype=activation_dtype)
    return ffn_sublayer(params["ff"], params["ln2"], y,
                        compute_dtype=compute_dtype, out_dtype=out_dtype)


# ---------------------------------------------------------------------------
# Pure-JAX reference (for a sanity check against the PyTorch semantics)
# ---------------------------------------------------------------------------
def _reference(params, y, z, mask, n_heads, eps=1e-6):
    def ln(p, x):
        mean = jnp.mean(x, -1, keepdims=True)
        std = jnp.std(x, -1, keepdims=True, ddof=1)
        return p["g"] * (x - mean) / (std + eps) + p["b"]

    def mha(p, q_in, kv_in):
        B, Sq, D = q_in.shape
        Sk = kv_in.shape[1]
        dk = D // n_heads

        def split(t, S):
            return t.reshape(B, S, n_heads, dk).transpose(0, 2, 1, 3)

        q = split(q_in @ p["wq"] + p["bq"], Sq)
        k = split(kv_in @ p["wk"] + p["bk"], Sk)
        v = split(kv_in @ p["wv"] + p["bv"], Sk)
        s = (q @ jnp.swapaxes(k, -1, -2)) / math.sqrt(dk)
        s = jnp.where(mask[:, None, :, :] == 0, -1e9, s)
        a = jax.nn.softmax(s, axis=-1)
        o = (a @ v).transpose(0, 2, 1, 3).reshape(B, Sq, D)
        return o @ p["wo"] + p["bo"]

    def ff(p, x):
        h = x @ p["w1"] + p["b1"]
        h = h * jax.nn.sigmoid(h)
        return h @ p["w2"] + p["b2"]

    yn = ln(params["ln0"], y)
    y = y + mha(params["self_attn"], yn, yn)
    y = y + mha(params["cross_attn"], ln(params["ln1"], y), z)
    return y + ff(params["ff"], ln(params["ln2"], y))


# ---------------------------------------------------------------------------
# Parameter init (weights stored pre-transposed: (in_features, out_features))
# ---------------------------------------------------------------------------
def _init_attn(key, d_model, scale=0.05):
    kq, kk, kv, ko = jax.random.split(key, 4)

    def w(k):
        return scale * jax.random.normal(k, (d_model, d_model), jnp.float32)

    zb = jnp.zeros((d_model,), jnp.float32)
    return {"wq": w(kq), "bq": zb, "wk": w(kk), "bk": zb,
            "wv": w(kv), "bv": zb, "wo": w(ko), "bo": zb}


def _init_ff(key, d_model, d_ff, scale=0.05):
    k1, k2 = jax.random.split(key, 2)
    return {"w1": scale * jax.random.normal(k1, (d_model, d_ff), jnp.float32),
            "b1": jnp.zeros((d_ff,), jnp.float32),
            "w2": scale * jax.random.normal(k2, (d_ff, d_model), jnp.float32),
            "b2": jnp.zeros((d_model,), jnp.float32)}


def _init_ln(d_model):
    return {"g": jnp.ones((d_model,), jnp.float32),
            "b": jnp.zeros((d_model,), jnp.float32)}


def init_params(key, d_model, d_ff):
    k_sa, k_ca, k_ff = jax.random.split(key, 3)
    return {"self_attn": _init_attn(k_sa, d_model),
            "cross_attn": _init_attn(k_ca, d_model),
            "ff": _init_ff(k_ff, d_model, d_ff),
            "ln0": _init_ln(d_model),
            "ln1": _init_ln(d_model),
            "ln2": _init_ln(d_model)}


# ---------------------------------------------------------------------------
# main
# ---------------------------------------------------------------------------
if __name__ == "__main__":
    B, S, n_heads, d_model, d_ff = 2, 8, 4, 32, 64

    key = jax.random.PRNGKey(0)
    k_param, k_y, k_z = jax.random.split(key, 3)
    params = init_params(k_param, d_model, d_ff)

    y = jax.random.normal(k_y, (B, S, d_model), jnp.float32)
    z = jax.random.normal(k_z, (B, S, d_model), jnp.float32)

    # Padding-style key mask: batch 0 sees all 8 positions, batch 1 sees 6.
    lengths = jnp.array([S, S - 2])
    mask = (jnp.arange(S)[None, :] < lengths[:, None]).astype(jnp.float32)
    mask = mask.reshape(B, 1, S)

    out = trans_forward(params, y, z, mask, n_heads,
                        compute_dtype=jnp.bfloat16,
                        activation_dtype=jnp.bfloat16)
    out = jax.block_until_ready(out)

    assert out.shape == (B, S, d_model)
    assert bool(jnp.all(jnp.isfinite(out)))

    # loose tolerance: bf16 matmul operands + bf16 inter-sublayer carries
    # + approx softmax reciprocal vs f32 reference
    ref = _reference(params, y, z, mask, n_heads)
    err = float(jnp.max(jnp.abs(out.astype(jnp.float32) - ref)))
    assert err < 0.1, f"max abs err vs reference: {err}"

    print("KERNEL_OK")
</pallas_src>

<mosaic_0001>
module attributes {stable_mosaic.version = 11 : i64} {
  func.func @_attn_sublayer_kernel(%arg0: i32, %arg1: memref<1x8x32xf32, #tpu.memory_space<vmem>>, %arg2: memref<1x1x8xf32, #tpu.memory_space<vmem>>, %arg3: memref<32x96xbf16, #tpu.memory_space<vmem>>, %arg4: memref<1x96xf32, #tpu.memory_space<vmem>>, %arg5: memref<32x32xbf16, #tpu.memory_space<vmem>>, %arg6: memref<1x32xf32, #tpu.memory_space<vmem>>, %arg7: memref<1x32xf32, #tpu.memory_space<vmem>>, %arg8: memref<1x32xf32, #tpu.memory_space<vmem>>, %arg9: memref<1x8x32xbf16, #tpu.memory_space<vmem>>) attributes {dimension_semantics = [#tpu.dimension_semantics<parallel>], iteration_bounds = array<i64: 2>, scalar_prefetch = 0 : i64, scratch_operands = 0 : i64, tpu.core_type = #tpu.core_type<tc>, window_params = [{transform_indices = @transform_0, window_bounds = array<i64: 1, 8, 32>}, {transform_indices = @transform_1, window_bounds = array<i64: 1, 1, 8>}, {pipeline_mode = #tpu.pipeline_mode<synchronous>, transform_indices = @transform_2, window_bounds = array<i64: 32, 96>}, {pipeline_mode = #tpu.pipeline_mode<synchronous>, transform_indices = @transform_3, window_bounds = array<i64: 1, 96>}, {pipeline_mode = #tpu.pipeline_mode<synchronous>, transform_indices = @transform_4, window_bounds = array<i64: 32, 32>}, {pipeline_mode = #tpu.pipeline_mode<synchronous>, transform_indices = @transform_5, window_bounds = array<i64: 1, 32>}, {pipeline_mode = #tpu.pipeline_mode<synchronous>, transform_indices = @transform_6, window_bounds = array<i64: 1, 32>}, {pipeline_mode = #tpu.pipeline_mode<synchronous>, transform_indices = @transform_7, window_bounds = array<i64: 1, 32>}, {transform_indices = @transform_8, window_bounds = array<i64: 1, 8, 32>}]} {
    %c0 = arith.constant 0 : index
    %c0_0 = arith.constant 0 : index
    %c0_1 = arith.constant 0 : index
    %0 = vector.load %arg1[%c0, %c0_0, %c0_1] : memref<1x8x32xf32, #tpu.memory_space<vmem>>, vector<1x8x32xf32>
    %1 = vector.shape_cast %0 : vector<1x8x32xf32> to vector<8x32xf32>
    %cst = arith.constant dense<0.000000e+00> : vector<8xf32>
    %2 = vector.multi_reduction <add>, %1, %cst [1] : vector<8x32xf32> to vector<8xf32>
    %3 = vector.shape_cast %2 : vector<8xf32> to vector<8x1xf32>
    %cst_2 = arith.constant 3.200000e+01 : f32
    %4 = vector.broadcast %cst_2 : f32 to vector<8x1xf32>
    %5 = arith.divf %3, %4 : vector<8x1xf32>
    %6 = vector.broadcast %5 : vector<8x1xf32> to vector<8x32xf32>
    %7 = arith.subf %1, %6 : vector<8x32xf32>
    %8 = arith.mulf %7, %7 : vector<8x32xf32>
    %cst_3 = arith.constant dense<0.000000e+00> : vector<8xf32>
    %9 = vector.multi_reduction <add>, %8, %cst_3 [1] : vector<8x32xf32> to vector<8xf32>
    %10 = vector.shape_cast %9 : vector<8xf32> to vector<8x1xf32>
    %cst_4 = arith.constant 3.100000e+01 : f32
    %11 = vector.broadcast %cst_4 : f32 to vector<8x1xf32>
    %12 = arith.divf %10, %11 : vector<8x1xf32>
    %c0_5 = arith.constant 0 : index
    %c0_6 = arith.constant 0 : index
    %13 = vector.load %arg7[%c0_5, %c0_6] : memref<1x32xf32, #tpu.memory_space<vmem>>, vector<1x32xf32>
    %14 = vector.broadcast %5 : vector<8x1xf32> to vector<8x32xf32>
    %15 = arith.subf %1, %14 : vector<8x32xf32>
    %16 = vector.broadcast %13 : vector<1x32xf32> to vector<8x32xf32>
    %17 = arith.mulf %16, %15 : vector<8x32xf32>
    %18 = math.sqrt %12 : vector<8x1xf32>
    %cst_7 = arith.constant 9.99999997E-7 : f32
    %19 = vector.broadcast %cst_7 : f32 to vector<8x1xf32>
    %20 = arith.addf %18, %19 : vector<8x1xf32>
    %21 = vector.broadcast %20 : vector<8x1xf32> to vector<8x32xf32>
    %22 = arith.divf %17, %21 : vector<8x32xf32>
    %c0_8 = arith.constant 0 : index
    %c0_9 = arith.constant 0 : index
    %23 = vector.load %arg8[%c0_8, %c0_9] : memref<1x32xf32, #tpu.memory_space<vmem>>, vector<1x32xf32>
    %24 = vector.broadcast %23 : vector<1x32xf32> to vector<8x32xf32>
    %25 = arith.addf %22, %24 : vector<8x32xf32>
    %26 = arith.truncf %25 : vector<8x32xf32> to vector<8x32xbf16>
    %c0_10 = arith.constant 0 : index
    %c0_11 = arith.constant 0 : index
    %27 = vector.load %arg3[%c0_10, %c0_11] : memref<32x96xbf16, #tpu.memory_space<vmem>>, vector<32x96xbf16>
    %cst_12 = arith.constant dense<0.000000e+00> : vector<8x96xf32>
    %28 = tpu.matmul %26, %27, %cst_12 {dimension_numbers = #tpu.dot_dimension_numbers<[1], [0], [0], [1], [0, 0, 1, 1], [], []>} : vector<8x32xbf16>, vector<32x96xbf16>, vector<8x96xf32> -> vector<8x96xf32>
    %c0_13 = arith.constant 0 : index
    %c0_14 = arith.constant 0 : index
    %29 = vector.load %arg4[%c0_13, %c0_14] : memref<1x96xf32, #tpu.memory_space<vmem>>, vector<1x96xf32>
    %30 = vector.broadcast %29 : vector<1x96xf32> to vector<8x96xf32>
    %31 = arith.addf %28, %30 : vector<8x96xf32>
    %32 = vector.extract_strided_slice %31 {offsets = [0, 0], sizes = [8, 32], strides = [1, 1]} : vector<8x96xf32> to vector<8x32xf32>
    %33 = vector.extract_strided_slice %31 {offsets = [0, 32], sizes = [8, 32], strides = [1, 1]} : vector<8x96xf32> to vector<8x32xf32>
    %34 = vector.extract_strided_slice %31 {offsets = [0, 64], sizes = [8, 32], strides = [1, 1]} : vector<8x96xf32> to vector<8x32xf32>
    %c0_15 = arith.constant 0 : index
    %c0_16 = arith.constant 0 : index
    %c0_17 = arith.constant 0 : index
    %35 = vector.load %arg2[%c0_15, %c0_16, %c0_17] : memref<1x1x8xf32, #tpu.memory_space<vmem>>, vector<1x1x8xf32>
    %36 = vector.shape_cast %35 : vector<1x1x8xf32> to vector<1x8xf32>
    %37 = vector.shape_cast %36 : vector<1x8xf32> to vector<1x8xf32>
    %38 = vector.broadcast %37 : vector<1x8xf32> to vector<8x8xf32>
    %39 = vector.extract_strided_slice %32 {offsets = [0, 0], sizes = [8, 8], strides = [1, 1]} : vector<8x32xf32> to vector<8x8xf32>
    %40 = arith.truncf %39 : vector<8x8xf32> to vector<8x8xbf16>
    %41 = vector.extract_strided_slice %33 {offsets = [0, 0], sizes = [8, 8], strides = [1, 1]} : vector<8x32xf32> to vector<8x8xf32>
    %42 = arith.truncf %41 : vector<8x8xf32> to vector<8x8xbf16>
    %43 = vector.extract_strided_slice %34 {offsets = [0, 0], sizes = [8, 8], strides = [1, 1]} : vector<8x32xf32> to vector<8x8xf32>
    %44 = arith.truncf %43 : vector<8x8xf32> to vector<8x8xbf16>
    %cst_18 = arith.constant dense<0.000000e+00> : vector<8x8xf32>
    %45 = tpu.matmul %40, %42, %cst_18 {dimension_numbers = #tpu.dot_dimension_numbers<[1], [1], [0], [0], [0, 0, 1, 0], [], []>} : vector<8x8xbf16>, vector<8x8xbf16>, vector<8x8xf32> -> vector<8x8xf32>
    %46 = arith.addf %45, %38 : vector<8x8xf32>
    %cst_19 = arith.constant dense<0xFF800000> : vector<8xf32>
    %47 = vector.multi_reduction <maximumf>, %46, %cst_19 [1] : vector<8x8xf32> to vector<8xf32>
    %48 = vector.shape_cast %47 : vector<8xf32> to vector<8x1xf32>
    %49 = vector.broadcast %48 : vector<8x1xf32> to vector<8x8xf32>
    %50 = arith.subf %46, %49 : vector<8x8xf32>
    %51 = math.exp %50 : vector<8x8xf32>
    %cst_20 = arith.constant dense<0.000000e+00> : vector<8xf32>
    %52 = vector.multi_reduction <add>, %51, %cst_20 [1] : vector<8x8xf32> to vector<8xf32>
    %53 = vector.shape_cast %52 : vector<8xf32> to vector<8x1xf32>
    %54 = tpu.reciprocal %53 {approx = true} : vector<8x1xf32> -> vector<8x1xf32>
    %55 = vector.broadcast %54 : vector<8x1xf32> to vector<8x8xf32>
    %56 = arith.mulf %51, %55 : vector<8x8xf32>
    %57 = arith.truncf %56 : vector<8x8xf32> to vector<8x8xbf16>
    %cst_21 = arith.constant dense<0.000000e+00> : vector<8x8xf32>
    %58 = tpu.matmul %57, %44, %cst_21 {dimension_numbers = #tpu.dot_dimension_numbers<[1], [0], [0], [1], [0, 0, 1, 1], [], []>} : vector<8x8xbf16>, vector<8x8xbf16>, vector<8x8xf32> -> vector<8x8xf32>
    %59 = vector.extract_strided_slice %32 {offsets = [0, 8], sizes = [8, 8], strides = [1, 1]} : vector<8x32xf32> to vector<8x8xf32>
    %60 = arith.truncf %59 : vector<8x8xf32> to vector<8x8xbf16>
    %61 = vector.extract_strided_slice %33 {offsets = [0, 8], sizes = [8, 8], strides = [1, 1]} : vector<8x32xf32> to vector<8x8xf32>
    %62 = arith.truncf %61 : vector<8x8xf32> to vector<8x8xbf16>
    %63 = vector.extract_strided_slice %34 {offsets = [0, 8], sizes = [8, 8], strides = [1, 1]} : vector<8x32xf32> to vector<8x8xf32>
    %64 = arith.truncf %63 : vector<8x8xf32> to vector<8x8xbf16>
    %cst_22 = arith.constant dense<0.000000e+00> : vector<8x8xf32>
    %65 = tpu.matmul %60, %62, %cst_22 {dimension_numbers = #tpu.dot_dimension_numbers<[1], [1], [0], [0], [0, 0, 1, 0], [], []>} : vector<8x8xbf16>, vector<8x8xbf16>, vector<8x8xf32> -> vector<8x8xf32>
    %66 = arith.addf %65, %38 : vector<8x8xf32>
    %cst_23 = arith.constant dense<0xFF800000> : vector<8xf32>
    %67 = vector.multi_reduction <maximumf>, %66, %cst_23 [1] : vector<8x8xf32> to vector<8xf32>
    %68 = vector.shape_cast %67 : vector<8xf32> to vector<8x1xf32>
    %69 = vector.broadcast %68 : vector<8x1xf32> to vector<8x8xf32>
    %70 = arith.subf %66, %69 : vector<8x8xf32>
    %71 = math.exp %70 : vector<8x8xf32>
    %cst_24 = arith.constant dense<0.000000e+00> : vector<8xf32>
    %72 = vector.multi_reduction <add>, %71, %cst_24 [1] : vector<8x8xf32> to vector<8xf32>
    %73 = vector.shape_cast %72 : vector<8xf32> to vector<8x1xf32>
    %74 = tpu.reciprocal %73 {approx = true} : vector<8x1xf32> -> vector<8x1xf32>
    %75 = vector.broadcast %74 : vector<8x1xf32> to vector<8x8xf32>
    %76 = arith.mulf %71, %75 : vector<8x8xf32>
    %77 = arith.truncf %76 : vector<8x8xf32> to vector<8x8xbf16>
    %cst_25 = arith.constant dense<0.000000e+00> : vector<8x8xf32>
    %78 = tpu.matmul %77, %64, %cst_25 {dimension_numbers = #tpu.dot_dimension_numbers<[1], [0], [0], [1], [0, 0, 1, 1], [], []>} : vector<8x8xbf16>, vector<8x8xbf16>, vector<8x8xf32> -> vector<8x8xf32>
    %79 = vector.extract_strided_slice %32 {offsets = [0, 16], sizes = [8, 8], strides = [1, 1]} : vector<8x32xf32> to vector<8x8xf32>
    %80 = arith.truncf %79 : vector<8x8xf32> to vector<8x8xbf16>
    %81 = vector.extract_strided_slice %33 {offsets = [0, 16], sizes = [8, 8], strides = [1, 1]} : vector<8x32xf32> to vector<8x8xf32>
    %82 = arith.truncf %81 : vector<8x8xf32> to vector<8x8xbf16>
    %83 = vector.extract_strided_slice %34 {offsets = [0, 16], sizes = [8, 8], strides = [1, 1]} : vector<8x32xf32> to vector<8x8xf32>
    %84 = arith.truncf %83 : vector<8x8xf32> to vector<8x8xbf16>
    %cst_26 = arith.constant dense<0.000000e+00> : vector<8x8xf32>
    %85 = tpu.matmul %80, %82, %cst_26 {dimension_numbers = #tpu.dot_dimension_numbers<[1], [1], [0], [0], [0, 0, 1, 0], [], []>} : vector<8x8xbf16>, vector<8x8xbf16>, vector<8x8xf32> -> vector<8x8xf32>
    %86 = arith.addf %85, %38 : vector<8x8xf32>
    %cst_27 = arith.constant dense<0xFF800000> : vector<8xf32>
    %87 = vector.multi_reduction <maximumf>, %86, %cst_27 [1] : vector<8x8xf32> to vector<8xf32>
    %88 = vector.shape_cast %87 : vector<8xf32> to vector<8x1xf32>
    %89 = vector.broadcast %88 : vector<8x1xf32> to vector<8x8xf32>
    %90 = arith.subf %86, %89 : vector<8x8xf32>
    %91 = math.exp %90 : vector<8x8xf32>
    %cst_28 = arith.constant dense<0.000000e+00> : vector<8xf32>
    %92 = vector.multi_reduction <add>, %91, %cst_28 [1] : vector<8x8xf32> to vector<8xf32>
    %93 = vector.shape_cast %92 : vector<8xf32> to vector<8x1xf32>
    %94 = tpu.reciprocal %93 {approx = true} : vector<8x1xf32> -> vector<8x1xf32>
    %95 = vector.broadcast %94 : vector<8x1xf32> to vector<8x8xf32>
    %96 = arith.mulf %91, %95 : vector<8x8xf32>
    %97 = arith.truncf %96 : vector<8x8xf32> to vector<8x8xbf16>
    %cst_29 = arith.constant dense<0.000000e+00> : vector<8x8xf32>
    %98 = tpu.matmul %97, %84, %cst_29 {dimension_numbers = #tpu.dot_dimension_numbers<[1], [0], [0], [1], [0, 0, 1, 1], [], []>} : vector<8x8xbf16>, vector<8x8xbf16>, vector<8x8xf32> -> vector<8x8xf32>
    %99 = vector.extract_strided_slice %32 {offsets = [0, 24], sizes = [8, 8], strides = [1, 1]} : vector<8x32xf32> to vector<8x8xf32>
    %100 = arith.truncf %99 : vector<8x8xf32> to vector<8x8xbf16>
    %101 = vector.extract_strided_slice %33 {offsets = [0, 24], sizes = [8, 8], strides = [1, 1]} : vector<8x32xf32> to vector<8x8xf32>
    %102 = arith.truncf %101 : vector<8x8xf32> to vector<8x8xbf16>
    %103 = vector.extract_strided_slice %34 {offsets = [0, 24], sizes = [8, 8], strides = [1, 1]} : vector<8x32xf32> to vector<8x8xf32>
    %104 = arith.truncf %103 : vector<8x8xf32> to vector<8x8xbf16>
    %cst_30 = arith.constant dense<0.000000e+00> : vector<8x8xf32>
    %105 = tpu.matmul %100, %102, %cst_30 {dimension_numbers = #tpu.dot_dimension_numbers<[1], [1], [0], [0], [0, 0, 1, 0], [], []>} : vector<8x8xbf16>, vector<8x8xbf16>, vector<8x8xf32> -> vector<8x8xf32>
    %106 = arith.addf %105, %38 : vector<8x8xf32>
    %cst_31 = arith.constant dense<0xFF800000> : vector<8xf32>
    %107 = vector.multi_reduction <maximumf>, %106, %cst_31 [1] : vector<8x8xf32> to vector<8xf32>
    %108 = vector.shape_cast %107 : vector<8xf32> to vector<8x1xf32>
    %109 = vector.broadcast %108 : vector<8x1xf32> to vector<8x8xf32>
    %110 = arith.subf %106, %109 : vector<8x8xf32>
    %111 = math.exp %110 : vector<8x8xf32>
    %cst_32 = arith.constant dense<0.000000e+00> : vector<8xf32>
    %112 = vector.multi_reduction <add>, %111, %cst_32 [1] : vector<8x8xf32> to vector<8xf32>
    %113 = vector.shape_cast %112 : vector<8xf32> to vector<8x1xf32>
    %114 = tpu.reciprocal %113 {approx = true} : vector<8x1xf32> -> vector<8x1xf32>
    %115 = vector.broadcast %114 : vector<8x1xf32> to vector<8x8xf32>
    %116 = arith.mulf %111, %115 : vector<8x8xf32>
    %117 = arith.truncf %116 : vector<8x8xf32> to vector<8x8xbf16>
    %cst_33 = arith.constant dense<0.000000e+00> : vector<8x8xf32>
    %118 = tpu.matmul %117, %104, %cst_33 {dimension_numbers = #tpu.dot_dimension_numbers<[1], [0], [0], [1], [0, 0, 1, 1], [], []>} : vector<8x8xbf16>, vector<8x8xbf16>, vector<8x8xf32> -> vector<8x8xf32>
    %119 = tpu.concatenate %58, %78, %98, %118 in 1 : vector<8x8xf32>, vector<8x8xf32>, vector<8x8xf32>, vector<8x8xf32> -> vector<8x32xf32>
    %120 = arith.truncf %119 : vector<8x32xf32> to vector<8x32xbf16>
    %c0_34 = arith.constant 0 : index
    %c0_35 = arith.constant 0 : index
    %121 = vector.load %arg5[%c0_34, %c0_35] : memref<32x32xbf16, #tpu.memory_space<vmem>>, vector<32x32xbf16>
    %cst_36 = arith.constant dense<0.000000e+00> : vector<8x32xf32>
    %122 = tpu.matmul %120, %121, %cst_36 {dimension_numbers = #tpu.dot_dimension_numbers<[1], [0], [0], [1], [0, 0, 1, 1], [], []>} : vector<8x32xbf16>, vector<32x32xbf16>, vector<8x32xf32> -> vector<8x32xf32>
    %123 = arith.addf %1, %122 : vector<8x32xf32>
    %c0_37 = arith.constant 0 : index
    %c0_38 = arith.constant 0 : index
    %124 = vector.load %arg6[%c0_37, %c0_38] : memref<1x32xf32, #tpu.memory_space<vmem>>, vector<1x32xf32>
    %125 = vector.broadcast %124 : vector<1x32xf32> to vector<8x32xf32>
    %126 = arith.addf %123, %125 : vector<8x32xf32>
    %127 = arith.truncf %126 : vector<8x32xf32> to vector<8x32xbf16>
    %c0_39 = arith.constant 0 : index
    %c0_40 = arith.constant 0 : index
    %c0_41 = arith.constant 0 : index
    %128 = vector.load %arg9[%c0_39, %c0_40, %c0_41] : memref<1x8x32xbf16, #tpu.memory_space<vmem>>, vector<1x8x32xbf16>
    %129 = vector.shape_cast %128 : vector<1x8x32xbf16> to vector<8x32xbf16>
    %130 = vector.shape_cast %127 : vector<8x32xbf16> to vector<1x8x32xbf16>
    tpu.vector_store %arg9[%c0_39, %c0_40, %c0_41], %130 {strides = array<i32>} : memref<1x8x32xbf16, #tpu.memory_space<vmem>>, vector<1x8x32xbf16>,
    return
  }
  func.func @transform_0(%arg0: i32) -> (i32, i32, i32) {
    %c0_i32 = arith.constant 0 : i32
    %c0_i32_0 = arith.constant 0 : i32
    %c0_i32_1 = arith.constant 0 : i32
    return %arg0, %c0_i32, %c0_i32_0 : i32, i32, i32
  }
  func.func @transform_1(%arg0: i32) -> (i32, i32, i32) {
    %c0_i32 = arith.constant 0 : i32
    %c0_i32_0 = arith.constant 0 : i32
    %c0_i32_1 = arith.constant 0 : i32
    return %arg0, %c0_i32, %c0_i32_0 : i32, i32, i32
  }
  func.func @transform_2(%arg0: i32) -> (i32, i32) {
    %c0_i32 = arith.constant 0 : i32
    %c0_i32_0 = arith.constant 0 : i32
    %c0_i32_1 = arith.constant 0 : i32
    return %c0_i32, %c0_i32_0 : i32, i32
  }
  func.func @transform_3(%arg0: i32) -> (i32, i32) {
    %c0_i32 = arith.constant 0 : i32
    %c0_i32_0 = arith.constant 0 : i32
    %c0_i32_1 = arith.constant 0 : i32
    return %c0_i32, %c0_i32_0 : i32, i32
  }
  func.func @transform_4(%arg0: i32) -> (i32, i32) {
    %c0_i32 = arith.constant 0 : i32
    %c0_i32_0 = arith.constant 0 : i32
    %c0_i32_1 = arith.constant 0 : i32
    return %c0_i32, %c0_i32_0 : i32, i32
  }
  func.func @transform_5(%arg0: i32) -> (i32, i32) {
    %c0_i32 = arith.constant 0 : i32
    %c0_i32_0 = arith.constant 0 : i32
    %c0_i32_1 = arith.constant 0 : i32
    return %c0_i32, %c0_i32_0 : i32, i32
  }
  func.func @transform_6(%arg0: i32) -> (i32, i32) {
    %c0_i32 = arith.constant 0 : i32
    %c0_i32_0 = arith.constant 0 : i32
    %c0_i32_1 = arith.constant 0 : i32
    return %c0_i32, %c0_i32_0 : i32, i32
  }
  func.func @transform_7(%arg0: i32) -> (i32, i32) {
    %c0_i32 = arith.constant 0 : i32
    %c0_i32_0 = arith.constant 0 : i32
    %c0_i32_1 = arith.constant 0 : i32
    return %c0_i32, %c0_i32_0 : i32, i32
  }
  func.func @transform_8(%arg0: i32) -> (i32, i32, i32) {
    %c0_i32 = arith.constant 0 : i32
    %c0_i32_0 = arith.constant 0 : i32
    %c0_i32_1 = arith.constant 0 : i32
    return %arg0, %c0_i32, %c0_i32_0 : i32, i32, i32
  }
}

module attributes {stable_mosaic.version = 11 : i64} {
  func.func @_attn_sublayer_kernel(%arg0: i32, %arg1: memref<1x8x32xf32, #tpu.memory_space<vmem>>, %arg2: memref<1x1x8xf32, #tpu.memory_space<vmem>>, %arg3: memref<32x96xbf16, #tpu.memory_space<vmem>>, %arg4: memref<1x96xf32, #tpu.memory_space<vmem>>, %arg5: memref<32x32xbf16, #tpu.memory_space<vmem>>, %arg6: memref<1x32xf32, #tpu.memory_space<vmem>>, %arg7: memref<1x32xf32, #tpu.memory_space<vmem>>, %arg8: memref<1x32xf32, #tpu.memory_space<vmem>>, %arg9: memref<1x8x32xbf16, #tpu.memory_space<vmem>>) attributes {dimension_semantics = [#tpu.dimension_semantics<parallel>], iteration_bounds = array<i64: 2>, scalar_prefetch = 0 : i64, scratch_operands = 0 : i64, tpu.core_type = #tpu.core_type<tc>, window_params = [{transform_indices = @transform_0, window_bounds = array<i64: 1, 8, 32>}, {transform_indices = @transform_1, window_bounds = array<i64: 1, 1, 8>}, {pipeline_mode = #tpu.pipeline_mode<synchronous>, transform_indices = @transform_2, window_bounds = array<i64: 32, 96>}, {pipeline_mode = #tpu.pipeline_mode<synchronous>, transform_indices = @transform_3, window_bounds = array<i64: 1, 96>}, {pipeline_mode = #tpu.pipeline_mode<synchronous>, transform_indices = @transform_4, window_bounds = array<i64: 32, 32>}, {pipeline_mode = #tpu.pipeline_mode<synchronous>, transform_indices = @transform_5, window_bounds = array<i64: 1, 32>}, {pipeline_mode = #tpu.pipeline_mode<synchronous>, transform_indices = @transform_6, window_bounds = array<i64: 1, 32>}, {pipeline_mode = #tpu.pipeline_mode<synchronous>, transform_indices = @transform_7, window_bounds = array<i64: 1, 32>}, {transform_indices = @transform_8, window_bounds = array<i64: 1, 8, 32>}]} {
    %c0 = arith.constant 0 : index
    %c0_0 = arith.constant 0 : index
    %c0_1 = arith.constant 0 : index
    %0 = vector.load %arg1[%c0, %c0_0, %c0_1] : memref<1x8x32xf32, #tpu.memory_space<vmem>>, vector<1x8x32xf32>
    %1 = vector.shape_cast %0 : vector<1x8x32xf32> to vector<8x32xf32>
    %cst = arith.constant dense<0.000000e+00> : vector<8xf32>
    %2 = vector.multi_reduction <add>, %1, %cst [1] : vector<8x32xf32> to vector<8xf32>
    %3 = vector.shape_cast %2 : vector<8xf32> to vector<8x1xf32>
    %cst_2 = arith.constant 3.200000e+01 : f32
    %4 = vector.broadcast %cst_2 : f32 to vector<8x1xf32>
    %5 = arith.divf %3, %4 : vector<8x1xf32>
    %6 = vector.broadcast %5 : vector<8x1xf32> to vector<8x32xf32>
    %7 = arith.subf %1, %6 : vector<8x32xf32>
    %8 = arith.mulf %7, %7 : vector<8x32xf32>
    %cst_3 = arith.constant dense<0.000000e+00> : vector<8xf32>
    %9 = vector.multi_reduction <add>, %8, %cst_3 [1] : vector<8x32xf32> to vector<8xf32>
    %10 = vector.shape_cast %9 : vector<8xf32> to vector<8x1xf32>
    %cst_4 = arith.constant 3.100000e+01 : f32
    %11 = vector.broadcast %cst_4 : f32 to vector<8x1xf32>
    %12 = arith.divf %10, %11 : vector<8x1xf32>
    %c0_5 = arith.constant 0 : index
    %c0_6 = arith.constant 0 : index
    %13 = vector.load %arg7[%c0_5, %c0_6] : memref<1x32xf32, #tpu.memory_space<vmem>>, vector<1x32xf32>
    %14 = vector.broadcast %5 : vector<8x1xf32> to vector<8x32xf32>
    %15 = arith.subf %1, %14 : vector<8x32xf32>
    %16 = vector.broadcast %13 : vector<1x32xf32> to vector<8x32xf32>
    %17 = arith.mulf %16, %15 : vector<8x32xf32>
    %18 = math.sqrt %12 : vector<8x1xf32>
    %cst_7 = arith.constant 9.99999997E-7 : f32
    %19 = vector.broadcast %cst_7 : f32 to vector<8x1xf32>
    %20 = arith.addf %18, %19 : vector<8x1xf32>
    %21 = vector.broadcast %20 : vector<8x1xf32> to vector<8x32xf32>
    %22 = arith.divf %17, %21 : vector<8x32xf32>
    %c0_8 = arith.constant 0 : index
    %c0_9 = arith.constant 0 : index
    %23 = vector.load %arg8[%c0_8, %c0_9] : memref<1x32xf32, #tpu.memory_space<vmem>>, vector<1x32xf32>
    %24 = vector.broadcast %23 : vector<1x32xf32> to vector<8x32xf32>
    %25 = arith.addf %22, %24 : vector<8x32xf32>
    %26 = arith.truncf %25 : vector<8x32xf32> to vector<8x32xbf16>
    %c0_10 = arith.constant 0 : index
    %c0_11 = arith.constant 0 : index
    %27 = vector.load %arg3[%c0_10, %c0_11] : memref<32x96xbf16, #tpu.memory_space<vmem>>, vector<32x96xbf16>
    %cst_12 = arith.constant dense<0.000000e+00> : vector<8x96xf32>
    %28 = tpu.matmul %26, %27, %cst_12 {dimension_numbers = #tpu.dot_dimension_numbers<[1], [0], [0], [1], [0, 0, 1, 1], [], []>} : vector<8x32xbf16>, vector<32x96xbf16>, vector<8x96xf32> -> vector<8x96xf32>
    %c0_13 = arith.constant 0 : index
    %c0_14 = arith.constant 0 : index
    %29 = vector.load %arg4[%c0_13, %c0_14] : memref<1x96xf32, #tpu.memory_space<vmem>>, vector<1x96xf32>
    %30 = vector.broadcast %29 : vector<1x96xf32> to vector<8x96xf32>
    %31 = arith.addf %28, %30 : vector<8x96xf32>
    %32 = vector.extract_strided_slice %31 {offsets = [0, 0], sizes = [8, 32], strides = [1, 1]} : vector<8x96xf32> to vector<8x32xf32>
    %33 = vector.extract_strided_slice %31 {offsets = [0, 32], sizes = [8, 32], strides = [1, 1]} : vector<8x96xf32> to vector<8x32xf32>
    %34 = vector.extract_strided_slice %31 {offsets = [0, 64], sizes = [8, 32], strides = [1, 1]} : vector<8x96xf32> to vector<8x32xf32>
    %c0_15 = arith.constant 0 : index
    %c0_16 = arith.constant 0 : index
    %c0_17 = arith.constant 0 : index
    %35 = vector.load %arg2[%c0_15, %c0_16, %c0_17] : memref<1x1x8xf32, #tpu.memory_space<vmem>>, vector<1x1x8xf32>
    %36 = vector.shape_cast %35 : vector<1x1x8xf32> to vector<1x8xf32>
    %37 = vector.shape_cast %36 : vector<1x8xf32> to vector<1x8xf32>
    %38 = vector.broadcast %37 : vector<1x8xf32> to vector<8x8xf32>
    %39 = vector.extract_strided_slice %32 {offsets = [0, 0], sizes = [8, 8], strides = [1, 1]} : vector<8x32xf32> to vector<8x8xf32>
    %40 = arith.truncf %39 : vector<8x8xf32> to vector<8x8xbf16>
    %41 = vector.extract_strided_slice %33 {offsets = [0, 0], sizes = [8, 8], strides = [1, 1]} : vector<8x32xf32> to vector<8x8xf32>
    %42 = arith.truncf %41 : vector<8x8xf32> to vector<8x8xbf16>
    %43 = vector.extract_strided_slice %34 {offsets = [0, 0], sizes = [8, 8], strides = [1, 1]} : vector<8x32xf32> to vector<8x8xf32>
    %44 = arith.truncf %43 : vector<8x8xf32> to vector<8x8xbf16>
    %cst_18 = arith.constant dense<0.000000e+00> : vector<8x8xf32>
    %45 = tpu.matmul %40, %42, %cst_18 {dimension_numbers = #tpu.dot_dimension_numbers<[1], [1], [0], [0], [0, 0, 1, 0], [], []>} : vector<8x8xbf16>, vector<8x8xbf16>, vector<8x8xf32> -> vector<8x8xf32>
    %46 = arith.addf %45, %38 : vector<8x8xf32>
    %cst_19 = arith.constant dense<0xFF800000> : vector<8xf32>
    %47 = vector.multi_reduction <maximumf>, %46, %cst_19 [1] : vector<8x8xf32> to vector<8xf32>
    %48 = vector.shape_cast %47 : vector<8xf32> to vector<8x1xf32>
    %49 = vector.broadcast %48 : vector<8x1xf32> to vector<8x8xf32>
    %50 = arith.subf %46, %49 : vector<8x8xf32>
    %51 = math.exp %50 : vector<8x8xf32>
    %cst_20 = arith.constant dense<0.000000e+00> : vector<8xf32>
    %52 = vector.multi_reduction <add>, %51, %cst_20 [1] : vector<8x8xf32> to vector<8xf32>
    %53 = vector.shape_cast %52 : vector<8xf32> to vector<8x1xf32>
    %54 = tpu.reciprocal %53 {approx = true} : vector<8x1xf32> -> vector<8x1xf32>
    %55 = vector.broadcast %54 : vector<8x1xf32> to vector<8x8xf32>
    %56 = arith.mulf %51, %55 : vector<8x8xf32>
    %57 = arith.truncf %56 : vector<8x8xf32> to vector<8x8xbf16>
    %cst_21 = arith.constant dense<0.000000e+00> : vector<8x8xf32>
    %58 = tpu.matmul %57, %44, %cst_21 {dimension_numbers = #tpu.dot_dimension_numbers<[1], [0], [0], [1], [0, 0, 1, 1], [], []>} : vector<8x8xbf16>, vector<8x8xbf16>, vector<8x8xf32> -> vector<8x8xf32>
    %59 = vector.extract_strided_slice %32 {offsets = [0, 8], sizes = [8, 8], strides = [1, 1]} : vector<8x32xf32> to vector<8x8xf32>
    %60 = arith.truncf %59 : vector<8x8xf32> to vector<8x8xbf16>
    %61 = vector.extract_strided_slice %33 {offsets = [0, 8], sizes = [8, 8], strides = [1, 1]} : vector<8x32xf32> to vector<8x8xf32>
    %62 = arith.truncf %61 : vector<8x8xf32> to vector<8x8xbf16>
    %63 = vector.extract_strided_slice %34 {offsets = [0, 8], sizes = [8, 8], strides = [1, 1]} : vector<8x32xf32> to vector<8x8xf32>
    %64 = arith.truncf %63 : vector<8x8xf32> to vector<8x8xbf16>
    %cst_22 = arith.constant dense<0.000000e+00> : vector<8x8xf32>
    %65 = tpu.matmul %60, %62, %cst_22 {dimension_numbers = #tpu.dot_dimension_numbers<[1], [1], [0], [0], [0, 0, 1, 0], [], []>} : vector<8x8xbf16>, vector<8x8xbf16>, vector<8x8xf32> -> vector<8x8xf32>
    %66 = arith.addf %65, %38 : vector<8x8xf32>
    %cst_23 = arith.constant dense<0xFF800000> : vector<8xf32>
    %67 = vector.multi_reduction <maximumf>, %66, %cst_23 [1] : vector<8x8xf32> to vector<8xf32>
    %68 = vector.shape_cast %67 : vector<8xf32> to vector<8x1xf32>
    %69 = vector.broadcast %68 : vector<8x1xf32> to vector<8x8xf32>
    %70 = arith.subf %66, %69 : vector<8x8xf32>
    %71 = math.exp %70 : vector<8x8xf32>
    %cst_24 = arith.constant dense<0.000000e+00> : vector<8xf32>
    %72 = vector.multi_reduction <add>, %71, %cst_24 [1] : vector<8x8xf32> to vector<8xf32>
    %73 = vector.shape_cast %72 : vector<8xf32> to vector<8x1xf32>
    %74 = tpu.reciprocal %73 {approx = true} : vector<8x1xf32> -> vector<8x1xf32>
    %75 = vector.broadcast %74 : vector<8x1xf32> to vector<8x8xf32>
    %76 = arith.mulf %71, %75 : vector<8x8xf32>
    %77 = arith.truncf %76 : vector<8x8xf32> to vector<8x8xbf16>
    %cst_25 = arith.constant dense<0.000000e+00> : vector<8x8xf32>
    %78 = tpu.matmul %77, %64, %cst_25 {dimension_numbers = #tpu.dot_dimension_numbers<[1], [0], [0], [1], [0, 0, 1, 1], [], []>} : vector<8x8xbf16>, vector<8x8xbf16>, vector<8x8xf32> -> vector<8x8xf32>
    %79 = vector.extract_strided_slice %32 {offsets = [0, 16], sizes = [8, 8], strides = [1, 1]} : vector<8x32xf32> to vector<8x8xf32>
    %80 = arith.truncf %79 : vector<8x8xf32> to vector<8x8xbf16>
    %81 = vector.extract_strided_slice %33 {offsets = [0, 16], sizes = [8, 8], strides = [1, 1]} : vector<8x32xf32> to vector<8x8xf32>
    %82 = arith.truncf %81 : vector<8x8xf32> to vector<8x8xbf16>
    %83 = vector.extract_strided_slice %34 {offsets = [0, 16], sizes = [8, 8], strides = [1, 1]} : vector<8x32xf32> to vector<8x8xf32>
    %84 = arith.truncf %83 : vector<8x8xf32> to vector<8x8xbf16>
    %cst_26 = arith.constant dense<0.000000e+00> : vector<8x8xf32>
    %85 = tpu.matmul %80, %82, %cst_26 {dimension_numbers = #tpu.dot_dimension_numbers<[1], [1], [0], [0], [0, 0, 1, 0], [], []>} : vector<8x8xbf16>, vector<8x8xbf16>, vector<8x8xf32> -> vector<8x8xf32>
    %86 = arith.addf %85, %38 : vector<8x8xf32>
    %cst_27 = arith.constant dense<0xFF800000> : vector<8xf32>
    %87 = vector.multi_reduction <maximumf>, %86, %cst_27 [1] : vector<8x8xf32> to vector<8xf32>
    %88 = vector.shape_cast %87 : vector<8xf32> to vector<8x1xf32>
    %89 = vector.broadcast %88 : vector<8x1xf32> to vector<8x8xf32>
    %90 = arith.subf %86, %89 : vector<8x8xf32>
    %91 = math.exp %90 : vector<8x8xf32>
    %cst_28 = arith.constant dense<0.000000e+00> : vector<8xf32>
    %92 = vector.multi_reduction <add>, %91, %cst_28 [1] : vector<8x8xf32> to vector<8xf32>
    %93 = vector.shape_cast %92 : vector<8xf32> to vector<8x1xf32>
    %94 = tpu.reciprocal %93 {approx = true} : vector<8x1xf32> -> vector<8x1xf32>
    %95 = vector.broadcast %94 : vector<8x1xf32> to vector<8x8xf32>
    %96 = arith.mulf %91, %95 : vector<8x8xf32>
    %97 = arith.truncf %96 : vector<8x8xf32> to vector<8x8xbf16>
    %cst_29 = arith.constant dense<0.000000e+00> : vector<8x8xf32>
    %98 = tpu.matmul %97, %84, %cst_29 {dimension_numbers = #tpu.dot_dimension_numbers<[1], [0], [0], [1], [0, 0, 1, 1], [], []>} : vector<8x8xbf16>, vector<8x8xbf16>, vector<8x8xf32> -> vector<8x8xf32>
    %99 = vector.extract_strided_slice %32 {offsets = [0, 24], sizes = [8, 8], strides = [1, 1]} : vector<8x32xf32> to vector<8x8xf32>
    %100 = arith.truncf %99 : vector<8x8xf32> to vector<8x8xbf16>
    %101 = vector.extract_strided_slice %33 {offsets = [0, 24], sizes = [8, 8], strides = [1, 1]} : vector<8x32xf32> to vector<8x8xf32>
    %102 = arith.truncf %101 : vector<8x8xf32> to vector<8x8xbf16>
    %103 = vector.extract_strided_slice %34 {offsets = [0, 24], sizes = [8, 8], strides = [1, 1]} : vector<8x32xf32> to vector<8x8xf32>
    %104 = arith.truncf %103 : vector<8x8xf32> to vector<8x8xbf16>
    %cst_30 = arith.constant dense<0.000000e+00> : vector<8x8xf32>
    %105 = tpu.matmul %100, %102, %cst_30 {dimension_numbers = #tpu.dot_dimension_numbers<[1], [1], [0], [0], [0, 0, 1, 0], [], []>} : vector<8x8xbf16>, vector<8x8xbf16>, vector<8x8xf32> -> vector<8x8xf32>
    %106 = arith.addf %105, %38 : vector<8x8xf32>
    %cst_31 = arith.constant dense<0xFF800000> : vector<8xf32>
    %107 = vector.multi_reduction <maximumf>, %106, %cst_31 [1] : vector<8x8xf32> to vector<8xf32>
    %108 = vector.shape_cast %107 : vector<8xf32> to vector<8x1xf32>
    %109 = vector.broadcast %108 : vector<8x1xf32> to vector<8x8xf32>
    %110 = arith.subf %106, %109 : vector<8x8xf32>
    %111 = math.exp %110 : vector<8x8xf32>
    %cst_32 = arith.constant dense<0.000000e+00> : vector<8xf32>
    %112 = vector.multi_reduction <add>, %111, %cst_32 [1] : vector<8x8xf32> to vector<8xf32>
    %113 = vector.shape_cast %112 : vector<8xf32> to vector<8x1xf32>
    %114 = tpu.reciprocal %113 {approx = true} : vector<8x1xf32> -> vector<8x1xf32>
    %115 = vector.broadcast %114 : vector<8x1xf32> to vector<8x8xf32>
    %116 = arith.mulf %111, %115 : vector<8x8xf32>
    %117 = arith.truncf %116 : vector<8x8xf32> to vector<8x8xbf16>
    %cst_33 = arith.constant dense<0.000000e+00> : vector<8x8xf32>
    %118 = tpu.matmul %117, %104, %cst_33 {dimension_numbers = #tpu.dot_dimension_numbers<[1], [0], [0], [1], [0, 0, 1, 1], [], []>} : vector<8x8xbf16>, vector<8x8xbf16>, vector<8x8xf32> -> vector<8x8xf32>
    %119 = tpu.concatenate %58, %78, %98, %118 in 1 : vector<8x8xf32>, vector<8x8xf32>, vector<8x8xf32>, vector<8x8xf32> -> vector<8x32xf32>
    %120 = arith.truncf %119 : vector<8x32xf32> to vector<8x32xbf16>
    %c0_34 = arith.constant 0 : index
    %c0_35 = arith.constant 0 : index
    %121 = vector.load %arg5[%c0_34, %c0_35] : memref<32x32xbf16, #tpu.memory_space<vmem>>, vector<32x32xbf16>
    %cst_36 = arith.constant dense<0.000000e+00> : vector<8x32xf32>
    %122 = tpu.matmul %120, %121, %cst_36 {dimension_numbers = #tpu.dot_dimension_numbers<[1], [0], [0], [1], [0, 0, 1, 1], [], []>} : vector<8x32xbf16>, vector<32x32xbf16>, vector<8x32xf32> -> vector<8x32xf32>
    %123 = arith.addf %1, %122 : vector<8x32xf32>
    %c0_37 = arith.constant 0 : index
    %c0_38 = arith.constant 0 : index
    %124 = vector.load %arg6[%c0_37, %c0_38] : memref<1x32xf32, #tpu.memory_space<vmem>>, vector<1x32xf32>
    %125 = vector.broadcast %124 : vector<1x32xf32> to vector<8x32xf32>
    %126 = arith.addf %123, %125 : vector<8x32xf32>
    %127 = arith.truncf %126 : vector<8x32xf32> to vector<8x32xbf16>
    %c0_39 = arith.constant 0 : index
    %c0_40 = arith.constant 0 : index
    %c0_41 = arith.constant 0 : index
    %128 = vector.load %arg9[%c0_39, %c0_40, %c0_41] : memref<1x8x32xbf16, #tpu.memory_space<vmem>>, vector<1x8x32xbf16>
    %129 = vector.shape_cast %128 : vector<1x8x32xbf16> to vector<8x32xbf16>
    %130 = vector.shape_cast %127 : vector<8x32xbf16> to vector<1x8x32xbf16>
    tpu.vector_store %arg9[%c0_39, %c0_40, %c0_41], %130 {strides = array<i32>} : memref<1x8x32xbf16, #tpu.memory_space<vmem>>, vector<1x8x32xbf16>,
    return
  }
  func.func @transform_0(%arg0: i32) -> (i32, i32, i32) {
    %c0_i32 = arith.constant 0 : i32
    %c0_i32_0 = arith.constant 0 : i32
    %c0_i32_1 = arith.constant 0 : i32
    return %arg0, %c0_i32, %c0_i32_0 : i32, i32, i32
  }
  func.func @transform_1(%arg0: i32) -> (i32, i32, i32) {
    %c0_i32 = arith.constant 0 : i32
    %c0_i32_0 = arith.constant 0 : i32
    %c0_i32_1 = arith.constant 0 : i32
    return %arg0, %c0_i32, %c0_i32_0 : i32, i32, i32
  }
  func.func @transform_2(%arg0: i32) -> (i32, i32) {
    %c0_i32 = arith.constant 0 : i32
    %c0_i32_0 = arith.constant 0 : i32
    %c0_i32_1 = arith.constant 0 : i32
    return %c0_i32, %c0_i32_0 : i32, i32
  }
  func.func @transform_3(%arg0: i32) -> (i32, i32) {
    %c0_i32 = arith.constant 0 : i32
    %c0_i32_0 = arith.constant 0 : i32
    %c0_i32_1 = arith.constant 0 : i32
    return %c0_i32, %c0_i32_0 : i32, i32
  }
  func.func @transform_4(%arg0: i32) -> (i32, i32) {
    %c0_i32 = arith.constant 0 : i32
    %c0_i32_0 = arith.constant 0 : i32
    %c0_i32_1 = arith.constant 0 : i32
    return %c0_i32, %c0_i32_0 : i32, i32
  }
  func.func @transform_5(%arg0: i32) -> (i32, i32) {
    %c0_i32 = arith.constant 0 : i32
    %c0_i32_0 = arith.constant 0 : i32
    %c0_i32_1 = arith.constant 0 : i32
    return %c0_i32, %c0_i32_0 : i32, i32
  }
  func.func @transform_6(%arg0: i32) -> (i32, i32) {
    %c0_i32 = arith.constant 0 : i32
    %c0_i32_0 = arith.constant 0 : i32
    %c0_i32_1 = arith.constant 0 : i32
    return %c0_i32, %c0_i32_0 : i32, i32
  }
  func.func @transform_7(%arg0: i32) -> (i32, i32) {
    %c0_i32 = arith.constant 0 : i32
    %c0_i32_0 = arith.constant 0 : i32
    %c0_i32_1 = arith.constant 0 : i32
    return %c0_i32, %c0_i32_0 : i32, i32
  }
  func.func @transform_8(%arg0: i32) -> (i32, i32, i32) {
    %c0_i32 = arith.constant 0 : i32
    %c0_i32_0 = arith.constant 0 : i32
    %c0_i32_1 = arith.constant 0 : i32
    return %arg0, %c0_i32, %c0_i32_0 : i32, i32, i32
  }
}

</mosaic_0001>

<llo_original>
// kernel: tpu_custom_call.1
$region0: #{tpu_custom_call.1}
  #allocation0 [shape = 'u32[]', space=smem, size = 0x4, offset = 0x4, fixed_abs, tag = 'smem constant byte address 0x4 - core index']
  #allocation1 [shape = 'u32[144,128]{1,0:T(1,128)}', space=vmem, size = 0x12000, scoped, tag = 'internal scratch']
  %s0 = inlined_call_operand.hbm [shape: f32[2,8,32], index: 0, kind: input, shape index: {}]
  %s1 = inlined_call_operand.vmem [shape: f32[2,1,8], index: 1, kind: input, shape index: {}]
  %s2 = inlined_call_operand.hbm [shape: bf16[32,96], index: 2, kind: input, shape index: {}]
  %s3 = inlined_call_operand.vmem [shape: f32[1,96], index: 3, kind: input, shape index: {}]
  %s4 = inlined_call_operand.hbm [shape: bf16[32,32], index: 4, kind: input, shape index: {}]
  %s5 = inlined_call_operand.vmem [shape: f32[1,32], index: 5, kind: input, shape index: {}]
  %s6 = inlined_call_operand.vmem [shape: f32[1,32], index: 6, kind: input, shape index: {}]
  %s7 = inlined_call_operand.vmem [shape: f32[1,32], index: 7, kind: input, shape index: {}]
  %s8 = inlined_call_operand.hbm [shape: bf16[2,8,32], index: 8, kind: output, shape index: {}]
  %s9 = sld [smem:[#allocation0]]
  $region77: #{tpu_custom_call.1} parent=0
    _
  %s11 = ssub.s32 1, %s9
  %s12 = scalar_select 0, %s11, %s9
  $region1: #{tpu_custom_call.1} parent=0
    #allocation2 [shape = 'u8[8192]{0}', space=vmem, size = 0x2000, scoped, tag = 'input window, operand 0']
    #allocation3 [shape = 's32[2]{0}', space=sflag, size = 0x8, scoped, tag = 'scoped memory for tpu_custom_call.1']
    #allocation4 [shape = 's32[2]{0}', space=sflag, size = 0x8, scoped, tag = 'scoped memory for tpu_custom_call.1']
    #allocation5 [shape = 'u8[8192]{0}', space=vmem, size = 0x2000, scoped, tag = 'input window, operand 2, single buffered']
    #allocation6 [shape = 's32[1]{0}', space=sflag, size = 0x4, scoped, tag = 'scoped memory for tpu_custom_call.1']
    #allocation7 [shape = 'u8[8192]{0}', space=vmem, size = 0x2000, scoped, tag = 'input window, operand 4, single buffered']
    #allocation8 [shape = 'u8[4096]{0}', space=vmem, size = 0x1000, scoped, tag = 'output window, operand 0']
    %13 = vsyncpa [#allocation3], 0
    %s14 = scalar_lea.sflag [#allocation3], 1
    %15 = vsyncpa %s14, 0
    %16 = vsyncpa [#allocation6], 0
    %17 = vsyncpa [#allocation4], 0
    %s18 = scalar_lea.sflag [#allocation4], 1
    %19 = vsyncpa %s18, 0
    loop: start=0, step=1, limit=4
    $region2: #{tpu_custom_call.1} parent=1 // loop_pre_header
      _
    $region3: #{tpu_custom_call.1} parent=1 // loop_header
      %s21 = sphi 0, %s25
      %p22 = scmp.ge.s32.totalorder %s21, 4
      %s31 = sphi 0, %s33
      %s34 = sphi 0, %s31
      %s35 = sphi 0, %s34
      %s51 = sphi 0, %s35
      %s57 = sphi 0, %s59
      %s60 = sphi 0, %s57
      %s61 = sphi 0, %s60
      %s77 = sphi 0, %s61
      %s81 = sphi 0, %s81
      %s83 = sphi 0, %s81
      %s84 = sphi 0, %s83
      %s98 = sphi 0, %s84
      %s102 = sphi 0, %s102
      %s104 = sphi 0, %s102
      %s105 = sphi 0, %s104
      %s119 = sphi 0, %s105
      %s123 = sphi 0, %s123
      %s125 = sphi 0, %s123
      %s126 = sphi 0, %s125
      %s140 = sphi 0, %s126
      %s144 = sphi 0, %s144
      %s146 = sphi 0, %s144
      %s147 = sphi 0, %s146
      %s161 = sphi 0, %s147
      %s165 = sphi 0, %s165
      %s167 = sphi 0, %s165
      %s168 = sphi 0, %s167
      %s182 = sphi 0, %s168
      %s186 = sphi 0, %s186
      %s188 = sphi 0, %s186
      %s189 = sphi 0, %s188
      %s203 = sphi 0, %s189
      %s209 = sphi 0, %s211
      %s212 = sphi 0, %s209
      %s213 = sphi 0, %s212
      %s229 = sphi 0, %s213
    $region4: #{tpu_custom_call.1} parent=1 // loop_header_branch
      %24 = sbr.rel (%p22) target = $region8
    $region5: #{tpu_custom_call.1} parent=1 // loop_body
      %s26 = ssub.s32 %s21, 1
      %s27 = ssub.s32 %s21, 2
      %s28 = sadd.s32 %s21, 1
      %s29 = ssub.s32 %s21, %s28
      %p30 = scmp.eq.s32.totalorder %s29, 0
      %s32 = sadd.s32 %s31, 1
      %s33 = scalar_select %p30, %s31, %s32
      %p36 = pneg %p30
      %p37 = scmp.eq.s32.totalorder %s21, 1
      %p38 = por %p36, %p37
      %p39 = scmp.ne.s32.totalorder %s31, %s34
      %p40 = scmp.eq.s32.totalorder %s21, 0
      %p41 = por %p39, %p40
      %p42 = scmp.ne.s32.totalorder %s31, %s34
      %p43 = scmp.eq.s32.totalorder %s26, 1
      %p44 = por %p42, %p43
      %p45 = scmp.ne.s32.totalorder %s34, %s35
      %p46 = scmp.eq.s32.totalorder %s26, 0
      %p47 = por %p45, %p46
      %p48 = scmp.ne.s32.totalorder %s34, %s35
      %p49 = scmp.eq.s32.totalorder %s27, 1
      %p50 = por %p48, %p49
      %p52 = scmp.ne.s32.totalorder %s35, %s51
      %p53 = scmp.eq.s32.totalorder %s27, 0
      %p54 = por %p52, %p53
      %s55 = ssub.s32 %s21, %s28
      %p56 = scmp.eq.s32.totalorder %s55, 0
      %s58 = sadd.s32 %s57, 1
      %s59 = scalar_select %p56, %s57, %s58
      %p62 = pneg %p56
      %p63 = scmp.eq.s32.totalorder %s21, 1
      %p64 = por %p62, %p63
      %p65 = scmp.ne.s32.totalorder %s57, %s60
      %p66 = scmp.eq.s32.totalorder %s21, 0
      %p67 = por %p65, %p66
      %p68 = scmp.ne.s32.totalorder %s57, %s60
      %p69 = scmp.eq.s32.totalorder %s26, 1
      %p70 = por %p68, %p69
      %p71 = scmp.ne.s32.totalorder %s60, %s61
      %p72 = scmp.eq.s32.totalorder %s26, 0
      %p73 = por %p71, %p72
      %p74 = scmp.ne.s32.totalorder %s60, %s61
      %p75 = scmp.eq.s32.totalorder %s27, 1
      %p76 = por %p74, %p75
      %p78 = scmp.ne.s32.totalorder %s61, %s77
      %p79 = scmp.eq.s32.totalorder %s27, 0
      %p80 = por %p78, %p79
      %s82 = sadd.s32 %s81, 1
      %p85 = scmp.eq.s32.totalorder %s21, 1
      %p86 = scmp.ne.s32.totalorder %s81, %s83
      %p87 = scmp.eq.s32.totalorder %s21, 0
      %p88 = por %p86, %p87
      %p89 = scmp.ne.s32.totalorder %s81, %s83
      %p90 = scmp.eq.s32.totalorder %s26, 1
      %p91 = por %p89, %p90
      %p92 = scmp.ne.s32.totalorder %s83, %s84
      %p93 = scmp.eq.s32.totalorder %s26, 0
      %p94 = por %p92, %p93
      %p95 = scmp.ne.s32.totalorder %s83, %s84
      %p96 = scmp.eq.s32.totalorder %s27, 1
      %p97 = por %p95, %p96
      %p99 = scmp.ne.s32.totalorder %s84, %s98
      %p100 = scmp.eq.s32.totalorder %s27, 0
      %p101 = por %p99, %p100
      %s103 = sadd.s32 %s102, 1
      %p106 = scmp.eq.s32.totalorder %s21, 1
      %p107 = scmp.ne.s32.totalorder %s102, %s104
      %p108 = scmp.eq.s32.totalorder %s21, 0
      %p109 = por %p107, %p108
      %p110 = scmp.ne.s32.totalorder %s102, %s104
      %p111 = scmp.eq.s32.totalorder %s26, 1
      %p112 = por %p110, %p111
      %p113 = scmp.ne.s32.totalorder %s104, %s105
      %p114 = scmp.eq.s32.totalorder %s26, 0
      %p115 = por %p113, %p114
      %p116 = scmp.ne.s32.totalorder %s104, %s105
      %p117 = scmp.eq.s32.totalorder %s27, 1
      %p118 = por %p116, %p117
      %p120 = scmp.ne.s32.totalorder %s105, %s119
      %p121 = scmp.eq.s32.totalorder %s27, 0
      %p122 = por %p120, %p121
      %s124 = sadd.s32 %s123, 1
      %p127 = scmp.eq.s32.totalorder %s21, 1
      %p128 = scmp.ne.s32.totalorder %s123, %s125
      %p129 = scmp.eq.s32.totalorder %s21, 0
      %p130 = por %p128, %p129
      %p131 = scmp.ne.s32.totalorder %s123, %s125
      %p132 = scmp.eq.s32.totalorder %s26, 1
      %p133 = por %p131, %p132
      %p134 = scmp.ne.s32.totalorder %s125, %s126
      %p135 = scmp.eq.s32.totalorder %s26, 0
      %p136 = por %p134, %p135
      %p137 = scmp.ne.s32.totalorder %s125, %s126
      %p138 = scmp.eq.s32.totalorder %s27, 1
      %p139 = por %p137, %p138
      %p141 = scmp.ne.s32.totalorder %s126, %s140
      %p142 = scmp.eq.s32.totalorder %s27, 0
      %p143 = por %p141, %p142
      %s145 = sadd.s32 %s144, 1
      %p148 = scmp.eq.s32.totalorder %s21, 1
      %p149 = scmp.ne.s32.totalorder %s144, %s146
      %p150 = scmp.eq.s32.totalorder %s21, 0
      %p151 = por %p149, %p150
      %p152 = scmp.ne.s32.totalorder %s144, %s146
      %p153 = scmp.eq.s32.totalorder %s26, 1
      %p154 = por %p152, %p153
      %p155 = scmp.ne.s32.totalorder %s146, %s147
      %p156 = scmp.eq.s32.totalorder %s26, 0
      %p157 = por %p155, %p156
      %p158 = scmp.ne.s32.totalorder %s146, %s147
      %p159 = scmp.eq.s32.totalorder %s27, 1
      %p160 = por %p158, %p159
      %p162 = scmp.ne.s32.totalorder %s147, %s161
      %p163 = scmp.eq.s32.totalorder %s27, 0
      %p164 = por %p162, %p163
      %s166 = sadd.s32 %s165, 1
      %p169 = scmp.eq.s32.totalorder %s21, 1
      %p170 = scmp.ne.s32.totalorder %s165, %s167
      %p171 = scmp.eq.s32.totalorder %s21, 0
      %p172 = por %p170, %p171
      %p173 = scmp.ne.s32.totalorder %s165, %s167
      %p174 = scmp.eq.s32.totalorder %s26, 1
      %p175 = por %p173, %p174
      %p176 = scmp.ne.s32.totalorder %s167, %s168
      %p177 = scmp.eq.s32.totalorder %s26, 0
      %p178 = por %p176, %p177
      %p179 = scmp.ne.s32.totalorder %s167, %s168
      %p180 = scmp.eq.s32.totalorder %s27, 1
      %p181 = por %p179, %p180
      %p183 = scmp.ne.s32.totalorder %s168, %s182
      %p184 = scmp.eq.s32.totalorder %s27, 0
      %p185 = por %p183, %p184
      %s187 = sadd.s32 %s186, 1
      %p190 = scmp.eq.s32.totalorder %s21, 1
      %p191 = scmp.ne.s32.totalorder %s186, %s188
      %p192 = scmp.eq.s32.totalorder %s21, 0
      %p193 = por %p191, %p192
      %p194 = scmp.ne.s32.totalorder %s186, %s188
      %p195 = scmp.eq.s32.totalorder %s26, 1
      %p196 = por %p194, %p195
      %p197 = scmp.ne.s32.totalorder %s188, %s189
      %p198 = scmp.eq.s32.totalorder %s26, 0
      %p199 = por %p197, %p198
      %p200 = scmp.ne.s32.totalorder %s188, %s189
      %p201 = scmp.eq.s32.totalorder %s27, 1
      %p202 = por %p200, %p201
      %p204 = scmp.ne.s32.totalorder %s189, %s203
      %p205 = scmp.eq.s32.totalorder %s27, 0
      %p206 = por %p204, %p205
      %s207 = ssub.s32 %s21, %s28
      %p208 = scmp.eq.s32.totalorder %s207, 0
      %s210 = sadd.s32 %s209, 1
      %s211 = scalar_select %p208, %s209, %s210
      %p214 = pneg %p208
      %p215 = scmp.eq.s32.totalorder %s21, 1
      %p216 = por %p214, %p215
      %p217 = scmp.ne.s32.totalorder %s209, %s212
      %p218 = scmp.eq.s32.totalorder %s21, 0
      %p219 = por %p217, %p218
      %p220 = scmp.ne.s32.totalorder %s209, %s212
      %p221 = scmp.eq.s32.totalorder %s26, 1
      %p222 = por %p220, %p221
      %p223 = scmp.ne.s32.totalorder %s212, %s213
      %p224 = scmp.eq.s32.totalorder %s26, 0
      %p225 = por %p223, %p224
      %p226 = scmp.ne.s32.totalorder %s212, %s213
      %p227 = scmp.eq.s32.totalorder %s27, 1
      %p228 = por %p226, %p227
      %p230 = scmp.ne.s32.totalorder %s213, %s229
      %p231 = scmp.eq.s32.totalorder %s27, 0
      %p232 = por %p230, %p231
      %p233 = scmp.le.s32.totalorder 1, %s21
      %p234 = scmp.lt.s32.totalorder %s21, 3
      %p235 = pnand %p233, %p234
      %p236 = pneg %p235
      // Predicated region
      $region9: #{tpu_custom_call.1} parent=5 // pred_check
        _
      $region10: #{tpu_custom_call.1} parent=5 // pred_check_branch
        %238 = sbr.rel (%p235) target = $region12
      $region11: #{tpu_custom_call.1} parent=5 // pred_region
        %s239 = ssub.s32 %s21, 1
        // Predicated region
        $region13: #{tpu_custom_call.1} parent=11 // pred_check
          %p240 = pneg %p94
        $region14: #{tpu_custom_call.1} parent=11 // pred_check_branch
          %242 = sbr.rel (%p240) target = $region16
        $region15: #{tpu_custom_call.1} parent=11 // pred_region
          %s244 = ssub.s32 256, 256
          %245 = vsyncadd [#allocation6], %s244
          %s246 = sshll.u32 [#allocation5], 4
          %s247 = int_to_ptr.vmem [resolvable:$true] %s246
          %252 = dma.hbm_to_vmem [thread:$0]  %s2, 256, %s247, [#allocation6], 64, 64, 4
        $region16: #{tpu_custom_call.1} parent=11 // pred_fallthru
          _
        // Predicated region
        $region17: #{tpu_custom_call.1} parent=11 // pred_check
          %p253 = pneg %p115
        $region18: #{tpu_custom_call.1} parent=11 // pred_check_branch
          %255 = sbr.rel (%p253) target = $region20
        $region19: #{tpu_custom_call.1} parent=11 // pred_region
          _
        $region20: #{tpu_custom_call.1} parent=11 // pred_fallthru
          _
        // Predicated region
        $region21: #{tpu_custom_call.1} parent=11 // pred_check
          %p256 = pneg %p136
        $region22: #{tpu_custom_call.1} parent=11 // pred_check_branch
          %258 = sbr.rel (%p256) target = $region24
        $region23: #{tpu_custom_call.1} parent=11 // pred_region
          %s260 = ssub.s32 256, 256
          %261 = vsyncadd [#allocation6], %s260
          %s262 = sshll.u32 [#allocation7], 4
          %s263 = int_to_ptr.vmem [resolvable:$true] %s262
          %268 = dma.hbm_to_vmem [thread:$0]  %s4, 256, %s263, [#allocation6], 64, 64, 4
        $region24: #{tpu_custom_call.1} parent=11 // pred_fallthru
          _
        // Predicated region
        $region25: #{tpu_custom_call.1} parent=11 // pred_check
          %p269 = pneg %p157
        $region26: #{tpu_custom_call.1} parent=11 // pred_check_branch
          %271 = sbr.rel (%p269) target = $region28
        $region27: #{tpu_custom_call.1} parent=11 // pred_region
          _
        $region28: #{tpu_custom_call.1} parent=11 // pred_fallthru
          _
        // Predicated region
        $region29: #{tpu_custom_call.1} parent=11 // pred_check
          %p272 = pneg %p178
        $region30: #{tpu_custom_call.1} parent=11 // pred_check_branch
          %274 = sbr.rel (%p272) target = $region32
        $region31: #{tpu_custom_call.1} parent=11 // pred_region
          _
        $region32: #{tpu_custom_call.1} parent=11 // pred_fallthru
          _
        // Predicated region
        $region33: #{tpu_custom_call.1} parent=11 // pred_check
          %p275 = pneg %p199
        $region34: #{tpu_custom_call.1} parent=11 // pred_check_branch
          %277 = sbr.rel (%p275) target = $region36
        $region35: #{tpu_custom_call.1} parent=11 // pred_region
          _
        $region36: #{tpu_custom_call.1} parent=11 // pred_fallthru
          _
      $region12: #{tpu_custom_call.1} parent=5 // pred_fallthru
        _
      %p278 = scmp.lt.s32.totalorder %s21, 2
      // Predicated region
      $region37: #{tpu_custom_call.1} parent=5 // pred_check
        %p279 = pneg %p278
      $region38: #{tpu_custom_call.1} parent=5 // pred_check_branch
        %281 = sbr.rel (%p279) target = $region40
      $region39: #{tpu_custom_call.1} parent=5 // pred_region
        // Predicated region
        $region41: #{tpu_custom_call.1} parent=39 // pred_check
          %p282 = pneg %p41
        $region42: #{tpu_custom_call.1} parent=39 // pred_check_branch
          %284 = sbr.rel (%p282) target = $region44
        $region43: #{tpu_custom_call.1} parent=39 // pred_region
          %s285 = sand.u32 %s31, 1
          %s286 = scalar_lea.sflag [#allocation3], %s285
          %s287 = sand.u32 %s31, 1
          %s288 = smul.addr %s287, 8
          %s289 = scalar_lea.vmem [#allocation2], %s288
          %s291 = ssub.s32 128, 128
          %292 = vsyncadd %s286, %s291
          %s293 = smul.addr %s21, 128
          %s294 = scalar_lea.hbm %s0, %s293
          %s296 = sshll.u32 %s289, 4
          %s297 = int_to_ptr.vmem [resolvable:$true] %s296
          %299 = dma.hbm_to_vmem [thread:$0]  %s294, 128, %s297, %s286
        $region44: #{tpu_custom_call.1} parent=39 // pred_fallthru
          _
        // Predicated region
        $region45: #{tpu_custom_call.1} parent=39 // pred_check
          %p300 = pneg %p67
        $region46: #{tpu_custom_call.1} parent=39 // pred_check_branch
          %302 = sbr.rel (%p300) target = $region48
        $region47: #{tpu_custom_call.1} parent=39 // pred_region
          %p303 = scmp.lt.s32.totalorder %s21, 1
          %s304 = scalar_select %p303, %s21, 1
          %s305 = scalar_lea.vmem %s1, %s304
        $region48: #{tpu_custom_call.1} parent=39 // pred_fallthru
          _
      $region40: #{tpu_custom_call.1} parent=5 // pred_fallthru
        _
      %p306 = scmp.le.s32.totalorder 1, %s21
      %p307 = scmp.lt.s32.totalorder %s21, 3
      %p308 = pnand %p306, %p307
      %p309 = pneg %p308
      // Predicated region
      $region49: #{tpu_custom_call.1} parent=5 // pred_check
        _
      $region50: #{tpu_custom_call.1} parent=5 // pred_check_branch
        %311 = sbr.rel (%p308) target = $region52
      $region51: #{tpu_custom_call.1} parent=5 // pred_region
        %s312 = ssub.s32 %s21, 1
        %s313 = sand.u32 %s34, 1
        %s314 = scalar_lea.sflag [#allocation3], %s313
        %s315 = sand.u32 %s34, 1
        %s316 = smul.addr %s315, 8
        %s317 = scalar_lea.vmem [#allocation2], %s316
        // Predicated region
        $region53: #{tpu_custom_call.1} parent=51 // pred_check
          %p318 = pneg %p47
        $region54: #{tpu_custom_call.1} parent=51 // pred_check_branch
          %320 = sbr.rel (%p318) target = $region56
        $region55: #{tpu_custom_call.1} parent=51 // pred_region
          %321 = dma.done %s314, 128
        $region56: #{tpu_custom_call.1} parent=51 // pred_fallthru
          _
        // Predicated region
        $region57: #{tpu_custom_call.1} parent=51 // pred_check
          %p322 = pneg %p94
        $region58: #{tpu_custom_call.1} parent=51 // pred_check_branch
          %324 = sbr.rel (%p322) target = $region60
        $region59: #{tpu_custom_call.1} parent=51 // pred_region
          %325 = dma.done [#allocation6], 256
        $region60: #{tpu_custom_call.1} parent=51 // pred_fallthru
          _
        // Predicated region
        $region61: #{tpu_custom_call.1} parent=51 // pred_check
          %p326 = pneg %p136
        $region62: #{tpu_custom_call.1} parent=51 // pred_check_branch
          %328 = sbr.rel (%p326) target = $region64
        $region63: #{tpu_custom_call.1} parent=51 // pred_region
          %329 = dma.done [#allocation6], 256
        $region64: #{tpu_custom_call.1} parent=51 // pred_fallthru
          _
        %s330 = sand.u32 %s34, 1
        %s331 = scalar_lea.sflag [#allocation3], %s330
        %s332 = sand.u32 %s34, 1
        %s333 = smul.addr %s332, 8
        %s334 = scalar_lea.vmem [#allocation2], %s333
        %p335 = pneg %p47
        %p336 = pneg %p44
        %p337 = scmp.lt.s32.totalorder %s26, 1
        %s338 = scalar_select %p337, %s26, 1
        %s339 = scalar_lea.vmem %s1, %s338
        %p340 = pneg %p73
        %p341 = pneg %p70
        %p342 = pneg %p94
        %p343 = pneg %p91
        %p344 = pneg %p115
        %p345 = pneg %p112
        %p346 = pneg %p136
        %p347 = pneg %p133
        %p348 = pneg %p157
        %p349 = pneg %p154
        %p350 = pneg %p178
        %p351 = pneg %p175
        %p352 = pneg %p199
        %p353 = pneg %p196
        %p354 = pneg %p225
        %p355 = pneg %p222
        %s356 = sand.u32 %s212, 1
        %s357 = scalar_lea.sflag [#allocation4], %s356
        %s358 = sand.u32 %s212, 1
        %s359 = smul.addr %s358, 4
        %s360 = scalar_lea.vmem [#allocation8], %s359
        %p361 = scmp.lt.s32.totalorder %s26, 1
        %s362 = scalar_select %p361, %s26, 1
        %s363 = scalar_lea.vmem %s1, %s362
        %v365 = vld [vmem:[%s317] sm:$0xff]
        %vm366 = vcmask 261120
        %v367 = vsel %vm366, %v365, 0.0
        %368 = vadd.xlane.f32.xlu0 %v367
        %v369 = vpop.xlane.xlu0 %368
        %v370 = vrcp.pop 32.0
        %v371 = vmul.f32 %v369, %v370
        %v372 = vsub.f32 %v365, %v371
        %v373 = vmul.f32 %v372, %v372
        %v374 = vsel %vm366, %v373, 0.0
        %375 = vadd.xlane.f32.xlu0 %v374
        %v376 = vpop.xlane.xlu0 %375
        %v377 = vrcp.pop 31.0
        %v378 = vmul.f32 %v376, %v377
        %v379 = vld [vmem:[%s6] sm:$0x1]
        %v381 = vlaneseq
        %v382 = vshrl.u32 %v381, 7
        %v383 = vsub.s32 0, %v382
        %v384 = vrot.slane %v379, %v383
        %v386 = vmul.f32 %v384, %v372
        %v387 = vrsqrt.pop %v378
        %v388 = vmul.f32 %v378, %v387
        %vm389 = vcmp.eq.f32.partialorder %v378, inf
        %v390 = vsel %vm389, %v378, %v388
        %vm391 = vcmp.eq.f32.partialorder %v378, 0.0
        %v392 = vand.u32 %v378, 2147483648
        %v393 = vsel %vm391, %v392, %v390
        %v394 = vadd.f32 %v393, 1e-06
        %v395 = vrcp.pop %v394
        %v396 = vmul.f32 %v386, %v395
        %v397 = vld [vmem:[%s7] sm:$0x1]
        %v399 = vlaneseq
        %v400 = vshrl.u32 %v399, 7
        %v401 = vsub.s32 0, %v400
        %v402 = vrot.slane %v397, %v401
        %v404 = vadd.f32 %v396, %v402
        %v405 = vpack.c.bf16 %v404, %v404
        %v406 = vld [vmem:[#allocation5] sm:$0xf]
        %v407 = vld [vmem:[#allocation5 + $0x4] sm:$0xf]
        %v408 = vld [vmem:[#allocation5 + $0x8] sm:$0xf]
        %v409 = vld [vmem:[#allocation5 + $0xc] sm:$0xf]
        %v410 = vld [vmem:[%s3] sm:$0x1]
        %v412 = vlaneseq
        %v413 = vshrl.u32 %v412, 7
        %v414 = vsub.s32 0, %v413
        %v415 = vrot.slane %v410, %v414
        %v421 = vunpack.c.l.b16 %v406
        %v422 = vunpack.c.l.b16 %v407
        %v423 = vunpack.c.l.b16 %v408
        %v424 = vunpack.c.l.b16 %v409
        %v425 = vpack.c.b16 %v422, %v421
        %v426 = vpack.c.b16 %v424, %v423
        %v430 = vsel %vm366, %v405, 0
        %432 = vmatprep.subr.bf16.mxu0 0
        %433 = vmatpush1.bf16.msra.mxu0 %v425
        %434 = vmatprep.subr.bf16.mxu0 0
        %435 = vmatpush1.bf16.msra.mxu0 %v426
        %436 = vmatprep.subr.bf16.mxu0 0
        %437 = vmatpush1.bf16.msra.mxu0 0
        %438 = vmatprep.subr.bf16.mxu0 0
        %439 = vmatpush1.bf16.msra.mxu0 0
        %440 = vmatprep.subr.bf16.mxu0 0
        %441 = vmatpush1.bf16.msra.mxu0 0
        %442 = vmatprep.subr.bf16.mxu0 0
        %443 = vmatpush1.bf16.msra.mxu0 0
        %444 = vmatprep.subr.bf16.mxu0 0
        %445 = vmatpush1.bf16.msra.mxu0 0
        %446 = vmatprep.subr.bf16.mxu0 0
        %447 = vmatpush1.bf16.msra.mxu0 0
        %448 = vmatprep.subr.bf16.mxu0 0
        %449 = vmatpush1.bf16.msra.mxu0 0
        %450 = vmatprep.subr.bf16.mxu0 0
        %451 = vmatpush1.bf16.msra.mxu0 0
        %452 = vmatprep.subr.bf16.mxu0 0
        %453 = vmatpush1.bf16.msra.mxu0 0
        %454 = vmatprep.subr.bf16.mxu0 0
        %455 = vmatpush1.bf16.msra.mxu0 0
        %456 = vmatprep.subr.bf16.mxu0 0
        %457 = vmatpush1.bf16.msra.mxu0 0
        %458 = vmatprep.subr.bf16.mxu0 0
        %459 = vmatpush1.bf16.msra.mxu0 0
        %460 = vmatprep.subr.bf16.mxu0 0
        %461 = vmatpush1.bf16.msra.mxu0 0
        %462 = vmatprep.subr.bf16.mxu0 0
        %463 = vmatpush1.bf16.msra.mxu0 0
        %464 = vmatprep.mubr.bf16.mxu0 0
        %465 = vmatmul.mubr.bf16.gmra.mrb[0].mxu0 %v430
        %v466 = vpop.f32.mrb[0].mxu0
        %v467 = vadd.f32 %v415, %v466
        %v468 = vpop.f32.mrb[0].mxu0
        %v469 = vpop.f32.mrb[0].mxu0
        %v470 = vpop.f32.mrb[0].mxu0
        %471 = vdwg.mxu0
        %v472 = vld [vmem:[%s363] sm:$0x1]
        %v474 = vlaneseq
        %v475 = vshrl.u32 %v474, 7
        %v476 = vsub.s32 0, %v475
        %v477 = vrot.slane %v472, %v476
        %v479 = vpack.c.bf16 %v467, %v467
        %481 = vrot.lane.b32.xlu0 %v479, 96
        %v482 = vpop.permute.xlu0 %481
        %vm483 = vcmask 64512
        %v485 = vsel %vm483, %v479, 0
        %v488 = vsel %vm483, %v482, 0
        %490 = vmatprep.subr.bf16.mxu0 0
        %491 = vmatpush1.bf16.xpose.msra.mxu0 %v488
        %492 = vmatprep.subr.bf16.mxu0 0
        %493 = vmatpush1.bf16.xpose.msra.mxu0 0
        %494 = vmatprep.subr.bf16.mxu0 0
        %495 = vmatpush1.bf16.xpose.msra.mxu0 0
        %496 = vmatprep.subr.bf16.mxu0 0
        %497 = vmatpush1.bf16.xpose.msra.mxu0 0
        %498 = vmatprep.subr.bf16.mxu0 0
        %499 = vmatpush1.bf16.xpose.msra.mxu0 0
        %500 = vmatprep.subr.bf16.mxu0 0
        %501 = vmatpush1.bf16.xpose.msra.mxu0 0
        %502 = vmatprep.subr.bf16.mxu0 0
        %503 = vmatpush1.bf16.xpose.msra.mxu0 0
        %504 = vmatprep.subr.bf16.mxu0 0
        %505 = vmatpush1.bf16.xpose.msra.mxu0 0
        %506 = vmatprep.subr.bf16.mxu0 0
        %507 = vmatpush1.bf16.xpose.msra.mxu0 0
        %508 = vmatprep.subr.bf16.mxu0 0
        %509 = vmatpush1.bf16.xpose.msra.mxu0 0
        %510 = vmatprep.subr.bf16.mxu0 0
        %511 = vmatpush1.bf16.xpose.msra.mxu0 0
        %512 = vmatprep.subr.bf16.mxu0 0
        %513 = vmatpush1.bf16.xpose.msra.mxu0 0
        %514 = vmatprep.subr.bf16.mxu0 0
        %515 = vmatpush1.bf16.xpose.msra.mxu0 0
        %516 = vmatprep.subr.bf16.mxu0 0
        %517 = vmatpush1.bf16.xpose.msra.mxu0 0
        %518 = vmatprep.subr.bf16.mxu0 0
        %519 = vmatpush1.bf16.xpose.msra.mxu0 0
        %520 = vmatprep.subr.bf16.mxu0 0
        %521 = vmatpush1.bf16.xpose.msra.mxu0 0
        %522 = vmatprep.mubr.bf16.mxu0 0
        %523 = vmatmul.mubr.bf16.gmra.mrb[0].mxu0 %v485
        %v524 = vpop.f32.mrb[0].mxu0
        %v525 = vadd.f32 %v477, %v524
        %v526 = vpop.f32.mrb[0].mxu0
        %v527 = vpop.f32.mrb[0].mxu0
        %v528 = vpop.f32.mrb[0].mxu0
        %529 = vdwg.mxu0
        %v530 = vsel %vm483, %v525, -inf
        %531 = vmax.xlane.f32.xlu0 %v530
        %v532 = vpop.xlane.xlu0 %531
        %v533 = vsub.f32 %v525, %v532
        %v534 = vmul.f32 %v533, 1.442695
        %v535 = vpow.pop %v534
        %v536 = vsel %vm483, %v535, 0.0
        %537 = vadd.xlane.f32.xlu0 %v536
        %v538 = vpop.xlane.xlu0 %537
        %v539 = vrcp.pop %v538
        %v540 = vmul.f32 %v535, %v539
        %v541 = vpack.c.bf16 %v540, %v540
        %542 = vrot.lane.b32.xlu0 %v479, 64
        %v543 = vpop.permute.xlu0 %542
        %v545 = vsel %vm483, %v541, 0
        %vm547 = vcmask 1043456
        %v549 = vsel %vm547, %v543, 0
        %551 = vmatprep.subr.bf16.mxu0 0
        %552 = vmatpush1.bf16.msra.mxu0 %v549
        %553 = vmatprep.subr.bf16.mxu0 0
        %554 = vmatpush1.bf16.msra.mxu0 0
        %555 = vmatprep.subr.bf16.mxu0 0
        %556 = vmatpush1.bf16.msra.mxu0 0
        %557 = vmatprep.subr.bf16.mxu0 0
        %558 = vmatpush1.bf16.msra.mxu0 0
        %559 = vmatprep.subr.bf16.mxu0 0
        %560 = vmatpush1.bf16.msra.mxu0 0
        %561 = vmatprep.subr.bf16.mxu0 0
        %562 = vmatpush1.bf16.msra.mxu0 0
        %563 = vmatprep.subr.bf16.mxu0 0
        %564 = vmatpush1.bf16.msra.mxu0 0
        %565 = vmatprep.subr.bf16.mxu0 0
        %566 = vmatpush1.bf16.msra.mxu0 0
        %567 = vmatprep.subr.bf16.mxu0 0
        %568 = vmatpush1.bf16.msra.mxu0 0
        %569 = vmatprep.subr.bf16.mxu0 0
        %570 = vmatpush1.bf16.msra.mxu0 0
        %571 = vmatprep.subr.bf16.mxu0 0
        %572 = vmatpush1.bf16.msra.mxu0 0
        %573 = vmatprep.subr.bf16.mxu0 0
        %574 = vmatpush1.bf16.msra.mxu0 0
        %575 = vmatprep.subr.bf16.mxu0 0
        %576 = vmatpush1.bf16.msra.mxu0 0
        %577 = vmatprep.subr.bf16.mxu0 0
        %578 = vmatpush1.bf16.msra.mxu0 0
        %579 = vmatprep.subr.bf16.mxu0 0
        %580 = vmatpush1.bf16.msra.mxu0 0
        %581 = vmatprep.subr.bf16.mxu0 0
        %582 = vmatpush1.bf16.msra.mxu0 0
        %583 = vmatprep.mubr.bf16.mxu0 0
        %584 = vmatmul.mubr.bf16.gmra.mrb[0].mxu0 %v545
        %v585 = vpop.f32.mrb[0].mxu0
        %v586 = vadd.f32 0.0, %v585
        %v587 = vpop.f32.mrb[0].mxu0
        %v588 = vpop.f32.mrb[0].mxu0
        %v589 = vpop.f32.mrb[0].mxu0
        %590 = vdwg.mxu0
        %591 = vrot.lane.b32.xlu0 %v479, 120
        %v592 = vpop.permute.xlu0 %591
        %593 = vrot.lane.b32.xlu0 %v479, 88
        %v594 = vpop.permute.xlu0 %593
        %v596 = vsel %vm483, %v592, 0
        %v599 = vsel %vm483, %v594, 0
        %601 = vmatprep.subr.bf16.mxu0 0
        %602 = vmatpush1.bf16.xpose.msra.mxu0 %v599
        %603 = vmatprep.subr.bf16.mxu0 0
        %604 = vmatpush1.bf16.xpose.msra.mxu0 0
        %605 = vmatprep.subr.bf16.mxu0 0
        %606 = vmatpush1.bf16.xpose.msra.mxu0 0
        %607 = vmatprep.subr.bf16.mxu0 0
        %608 = vmatpush1.bf16.xpose.msra.mxu0 0
        %609 = vmatprep.subr.bf16.mxu0 0
        %610 = vmatpush1.bf16.xpose.msra.mxu0 0
        %611 = vmatprep.subr.bf16.mxu0 0
        %612 = vmatpush1.bf16.xpose.msra.mxu0 0
        %613 = vmatprep.subr.bf16.mxu0 0
        %614 = vmatpush1.bf16.xpose.msra.mxu0 0
        %615 = vmatprep.subr.bf16.mxu0 0
        %616 = vmatpush1.bf16.xpose.msra.mxu0 0
        %617 = vmatprep.subr.bf16.mxu0 0
        %618 = vmatpush1.bf16.xpose.msra.mxu0 0
        %619 = vmatprep.subr.bf16.mxu0 0
        %620 = vmatpush1.bf16.xpose.msra.mxu0 0
        %621 = vmatprep.subr.bf16.mxu0 0
        %622 = vmatpush1.bf16.xpose.msra.mxu0 0
        %623 = vmatprep.subr.bf16.mxu0 0
        %624 = vmatpush1.bf16.xpose.msra.mxu0 0
        %625 = vmatprep.subr.bf16.mxu0 0
        %626 = vmatpush1.bf16.xpose.msra.mxu0 0
        %627 = vmatprep.subr.bf16.mxu0 0
        %628 = vmatpush1.bf16.xpose.msra.mxu0 0
        %629 = vmatprep.subr.bf16.mxu0 0
        %630 = vmatpush1.bf16.xpose.msra.mxu0 0
        %631 = vmatprep.subr.bf16.mxu0 0
        %632 = vmatpush1.bf16.xpose.msra.mxu0 0
        %633 = vmatprep.mubr.bf16.mxu0 0
        %634 = vmatmul.mubr.bf16.gmra.mrb[0].mxu0 %v596
        %v635 = vpop.f32.mrb[0].mxu0
        %v636 = vadd.f32 %v477, %v635
        %v637 = vpop.f32.mrb[0].mxu0
        %v638 = vpop.f32.mrb[0].mxu0
        %v639 = vpop.f32.mrb[0].mxu0
        %640 = vdwg.mxu0
        %v641 = vsel %vm483, %v636, -inf
        %642 = vmax.xlane.f32.xlu0 %v641
        %v643 = vpop.xlane.xlu0 %642
        %v644 = vsub.f32 %v636, %v643
        %v645 = vmul.f32 %v644, 1.442695
        %v646 = vpow.pop %v645
        %v647 = vsel %vm483, %v646, 0.0
        %648 = vadd.xlane.f32.xlu0 %v647
        %v649 = vpop.xlane.xlu0 %648
        %v650 = vrcp.pop %v649
        %v651 = vmul.f32 %v646, %v650
        %v652 = vpack.c.bf16 %v651, %v651
        %653 = vrot.lane.b32.xlu0 %v479, 56
        %v654 = vpop.permute.xlu0 %653
        %v656 = vsel %vm483, %v652, 0
        %v659 = vsel %vm547, %v654, 0
        %661 = vmatprep.subr.bf16.mxu0 0
        %662 = vmatpush1.bf16.msra.mxu0 %v659
        %663 = vmatprep.subr.bf16.mxu0 0
        %664 = vmatpush1.bf16.msra.mxu0 0
        %665 = vmatprep.subr.bf16.mxu0 0
        %666 = vmatpush1.bf16.msra.mxu0 0
        %667 = vmatprep.subr.bf16.mxu0 0
        %668 = vmatpush1.bf16.msra.mxu0 0
        %669 = vmatprep.subr.bf16.mxu0 0
        %670 = vmatpush1.bf16.msra.mxu0 0
        %671 = vmatprep.subr.bf16.mxu0 0
        %672 = vmatpush1.bf16.msra.mxu0 0
        %673 = vmatprep.subr.bf16.mxu0 0
        %674 = vmatpush1.bf16.msra.mxu0 0
        %675 = vmatprep.subr.bf16.mxu0 0
        %676 = vmatpush1.bf16.msra.mxu0 0
        %677 = vmatprep.subr.bf16.mxu0 0
        %678 = vmatpush1.bf16.msra.mxu0 0
        %679 = vmatprep.subr.bf16.mxu0 0
        %680 = vmatpush1.bf16.msra.mxu0 0
        %681 = vmatprep.subr.bf16.mxu0 0
        %682 = vmatpush1.bf16.msra.mxu0 0
        %683 = vmatprep.subr.bf16.mxu0 0
        %684 = vmatpush1.bf16.msra.mxu0 0
        %685 = vmatprep.subr.bf16.mxu0 0
        %686 = vmatpush1.bf16.msra.mxu0 0
        %687 = vmatprep.subr.bf16.mxu0 0
        %688 = vmatpush1.bf16.msra.mxu0 0
        %689 = vmatprep.subr.bf16.mxu0 0
        %690 = vmatpush1.bf16.msra.mxu0 0
        %691 = vmatprep.subr.bf16.mxu0 0
        %692 = vmatpush1.bf16.msra.mxu0 0
        %693 = vmatprep.mubr.bf16.mxu0 0
        %694 = vmatmul.mubr.bf16.gmra.mrb[0].mxu0 %v656
        %v695 = vpop.f32.mrb[0].mxu0
        %v696 = vadd.f32 0.0, %v695
        %v697 = vpop.f32.mrb[0].mxu0
        %v698 = vpop.f32.mrb[0].mxu0
        %v699 = vpop.f32.mrb[0].mxu0
        %700 = vdwg.mxu0
        %701 = vrot.lane.b32.xlu0 %v479, 112
        %v702 = vpop.permute.xlu0 %701
        %703 = vrot.lane.b32.xlu0 %v479, 80
        %v704 = vpop.permute.xlu0 %703
        %v706 = vsel %vm483, %v702, 0
        %v709 = vsel %vm483, %v704, 0
        %711 = vmatprep.subr.bf16.mxu0 0
        %712 = vmatpush1.bf16.xpose.msra.mxu0 %v709
        %713 = vmatprep.subr.bf16.mxu0 0
        %714 = vmatpush1.bf16.xpose.msra.mxu0 0
        %715 = vmatprep.subr.bf16.mxu0 0
        %716 = vmatpush1.bf16.xpose.msra.mxu0 0
        %717 = vmatprep.subr.bf16.mxu0 0
        %718 = vmatpush1.bf16.xpose.msra.mxu0 0
        %719 = vmatprep.subr.bf16.mxu0 0
        %720 = vmatpush1.bf16.xpose.msra.mxu0 0
        %721 = vmatprep.subr.bf16.mxu0 0
        %722 = vmatpush1.bf16.xpose.msra.mxu0 0
        %723 = vmatprep.subr.bf16.mxu0 0
        %724 = vmatpush1.bf16.xpose.msra.mxu0 0
        %725 = vmatprep.subr.bf16.mxu0 0
        %726 = vmatpush1.bf16.xpose.msra.mxu0 0
        %727 = vmatprep.subr.bf16.mxu0 0
        %728 = vmatpush1.bf16.xpose.msra.mxu0 0
        %729 = vmatprep.subr.bf16.mxu0 0
        %730 = vmatpush1.bf16.xpose.msra.mxu0 0
        %731 = vmatprep.subr.bf16.mxu0 0
        %732 = vmatpush1.bf16.xpose.msra.mxu0 0
        %733 = vmatprep.subr.bf16.mxu0 0
        %734 = vmatpush1.bf16.xpose.msra.mxu0 0
        %735 = vmatprep.subr.bf16.mxu0 0
        %736 = vmatpush1.bf16.xpose.msra.mxu0 0
        %737 = vmatprep.subr.bf16.mxu0 0
        %738 = vmatpush1.bf16.xpose.msra.mxu0 0
        %739 = vmatprep.subr.bf16.mxu0 0
        %740 = vmatpush1.bf16.xpose.msra.mxu0 0
        %741 = vmatprep.subr.bf16.mxu0 0
        %742 = vmatpush1.bf16.xpose.msra.mxu0 0
        %743 = vmatprep.mubr.bf16.mxu0 0
        %744 = vmatmul.mubr.bf16.gmra.mrb[0].mxu0 %v706
        %v745 = vpop.f32.mrb[0].mxu0
        %v746 = vadd.f32 %v477, %v745
        %v747 = vpop.f32.mrb[0].mxu0
        %v748 = vpop.f32.mrb[0].mxu0
        %v749 = vpop.f32.mrb[0].mxu0
        %750 = vdwg.mxu0
        %v751 = vsel %vm483, %v746, -inf
        %752 = vmax.xlane.f32.xlu0 %v751
        %v753 = vpop.xlane.xlu0 %752
        %v754 = vsub.f32 %v746, %v753
        %v755 = vmul.f32 %v754, 1.442695
        %v756 = vpow.pop %v755
        %v757 = vsel %vm483, %v756, 0.0
        %758 = vadd.xlane.f32.xlu0 %v757
        %v759 = vpop.xlane.xlu0 %758
        %v760 = vrcp.pop %v759
        %v761 = vmul.f32 %v756, %v760
        %v762 = vpack.c.bf16 %v761, %v761
        %763 = vrot.lane.b32.xlu0 %v479, 48
        %v764 = vpop.permute.xlu0 %763
        %v766 = vsel %vm483, %v762, 0
        %v769 = vsel %vm547, %v764, 0
        %771 = vmatprep.subr.bf16.mxu0 0
        %772 = vmatpush1.bf16.msra.mxu0 %v769
        %773 = vmatprep.subr.bf16.mxu0 0
        %774 = vmatpush1.bf16.msra.mxu0 0
        %775 = vmatprep.subr.bf16.mxu0 0
        %776 = vmatpush1.bf16.msra.mxu0 0
        %777 = vmatprep.subr.bf16.mxu0 0
        %778 = vmatpush1.bf16.msra.mxu0 0
        %779 = vmatprep.subr.bf16.mxu0 0
        %780 = vmatpush1.bf16.msra.mxu0 0
        %781 = vmatprep.subr.bf16.mxu0 0
        %782 = vmatpush1.bf16.msra.mxu0 0
        %783 = vmatprep.subr.bf16.mxu0 0
        %784 = vmatpush1.bf16.msra.mxu0 0
        %785 = vmatprep.subr.bf16.mxu0 0
        %786 = vmatpush1.bf16.msra.mxu0 0
        %787 = vmatprep.subr.bf16.mxu0 0
        %788 = vmatpush1.bf16.msra.mxu0 0
        %789 = vmatprep.subr.bf16.mxu0 0
        %790 = vmatpush1.bf16.msra.mxu0 0
        %791 = vmatprep.subr.bf16.mxu0 0
        %792 = vmatpush1.bf16.msra.mxu0 0
        %793 = vmatprep.subr.bf16.mxu0 0
        %794 = vmatpush1.bf16.msra.mxu0 0
        %795 = vmatprep.subr.bf16.mxu0 0
        %796 = vmatpush1.bf16.msra.mxu0 0
        %797 = vmatprep.subr.bf16.mxu0 0
        %798 = vmatpush1.bf16.msra.mxu0 0
        %799 = vmatprep.subr.bf16.mxu0 0
        %800 = vmatpush1.bf16.msra.mxu0 0
        %801 = vmatprep.subr.bf16.mxu0 0
        %802 = vmatpush1.bf16.msra.mxu0 0
        %803 = vmatprep.mubr.bf16.mxu0 0
        %804 = vmatmul.mubr.bf16.gmra.mrb[0].mxu0 %v766
        %v805 = vpop.f32.mrb[0].mxu0
        %v806 = vadd.f32 0.0, %v805
        %v807 = vpop.f32.mrb[0].mxu0
        %v808 = vpop.f32.mrb[0].mxu0
        %v809 = vpop.f32.mrb[0].mxu0
        %810 = vdwg.mxu0
        %811 = vrot.lane.b32.xlu0 %v479, 104
        %v812 = vpop.permute.xlu0 %811
        %813 = vrot.lane.b32.xlu0 %v479, 72
        %v814 = vpop.permute.xlu0 %813
        %v816 = vsel %vm483, %v812, 0
        %v819 = vsel %vm483, %v814, 0
        %821 = vmatprep.subr.bf16.mxu0 0
        %822 = vmatpush1.bf16.xpose.msra.mxu0 %v819
        %823 = vmatprep.subr.bf16.mxu0 0
        %824 = vmatpush1.bf16.xpose.msra.mxu0 0
        %825 = vmatprep.subr.bf16.mxu0 0
        %826 = vmatpush1.bf16.xpose.msra.mxu0 0
        %827 = vmatprep.subr.bf16.mxu0 0
        %828 = vmatpush1.bf16.xpose.msra.mxu0 0
        %829 = vmatprep.subr.bf16.mxu0 0
        %830 = vmatpush1.bf16.xpose.msra.mxu0 0
        %831 = vmatprep.subr.bf16.mxu0 0
        %832 = vmatpush1.bf16.xpose.msra.mxu0 0
        %833 = vmatprep.subr.bf16.mxu0 0
        %834 = vmatpush1.bf16.xpose.msra.mxu0 0
        %835 = vmatprep.subr.bf16.mxu0 0
        %836 = vmatpush1.bf16.xpose.msra.mxu0 0
        %837 = vmatprep.subr.bf16.mxu0 0
        %838 = vmatpush1.bf16.xpose.msra.mxu0 0
        %839 = vmatprep.subr.bf16.mxu0 0
        %840 = vmatpush1.bf16.xpose.msra.mxu0 0
        %841 = vmatprep.subr.bf16.mxu0 0
        %842 = vmatpush1.bf16.xpose.msra.mxu0 0
        %843 = vmatprep.subr.bf16.mxu0 0
        %844 = vmatpush1.bf16.xpose.msra.mxu0 0
        %845 = vmatprep.subr.bf16.mxu0 0
        %846 = vmatpush1.bf16.xpose.msra.mxu0 0
        %847 = vmatprep.subr.bf16.mxu0 0
        %848 = vmatpush1.bf16.xpose.msra.mxu0 0
        %849 = vmatprep.subr.bf16.mxu0 0
        %850 = vmatpush1.bf16.xpose.msra.mxu0 0
        %851 = vmatprep.subr.bf16.mxu0 0
        %852 = vmatpush1.bf16.xpose.msra.mxu0 0
        %853 = vmatprep.mubr.bf16.mxu0 0
        %854 = vmatmul.mubr.bf16.gmra.mrb[0].mxu0 %v816
        %v855 = vpop.f32.mrb[0].mxu0
        %v856 = vadd.f32 %v477, %v855
        %v857 = vpop.f32.mrb[0].mxu0
        %v858 = vpop.f32.mrb[0].mxu0
        %v859 = vpop.f32.mrb[0].mxu0
        %860 = vdwg.mxu0
        %v861 = vsel %vm483, %v856, -inf
        %862 = vmax.xlane.f32.xlu0 %v861
        %v863 = vpop.xlane.xlu0 %862
        %v864 = vsub.f32 %v856, %v863
        %v865 = vmul.f32 %v864, 1.442695
        %v866 = vpow.pop %v865
        %v867 = vsel %vm483, %v866, 0.0
        %868 = vadd.xlane.f32.xlu0 %v867
        %v869 = vpop.xlane.xlu0 %868
        %v870 = vrcp.pop %v869
        %v871 = vmul.f32 %v866, %v870
        %v872 = vpack.c.bf16 %v871, %v871
        %873 = vrot.lane.b32.xlu0 %v479, 40
        %v874 = vpop.permute.xlu0 %873
        %v876 = vsel %vm483, %v872, 0
        %v879 = vsel %vm547, %v874, 0
        %881 = vmatprep.subr.bf16.mxu0 0
        %882 = vmatpush1.bf16.msra.mxu0 %v879
        %883 = vmatprep.subr.bf16.mxu0 0
        %884 = vmatpush1.bf16.msra.mxu0 0
        %885 = vmatprep.subr.bf16.mxu0 0
        %886 = vmatpush1.bf16.msra.mxu0 0
        %887 = vmatprep.subr.bf16.mxu0 0
        %888 = vmatpush1.bf16.msra.mxu0 0
        %889 = vmatprep.subr.bf16.mxu0 0
        %890 = vmatpush1.bf16.msra.mxu0 0
        %891 = vmatprep.subr.bf16.mxu0 0
        %892 = vmatpush1.bf16.msra.mxu0 0
        %893 = vmatprep.subr.bf16.mxu0 0
        %894 = vmatpush1.bf16.msra.mxu0 0
        %895 = vmatprep.subr.bf16.mxu0 0
        %896 = vmatpush1.bf16.msra.mxu0 0
        %897 = vmatprep.subr.bf16.mxu0 0
        %898 = vmatpush1.bf16.msra.mxu0 0
        %899 = vmatprep.subr.bf16.mxu0 0
        %900 = vmatpush1.bf16.msra.mxu0 0
        %901 = vmatprep.subr.bf16.mxu0 0
        %902 = vmatpush1.bf16.msra.mxu0 0
        %903 = vmatprep.subr.bf16.mxu0 0
        %904 = vmatpush1.bf16.msra.mxu0 0
        %905 = vmatprep.subr.bf16.mxu0 0
        %906 = vmatpush1.bf16.msra.mxu0 0
        %907 = vmatprep.subr.bf16.mxu0 0
        %908 = vmatpush1.bf16.msra.mxu0 0
        %909 = vmatprep.subr.bf16.mxu0 0
        %910 = vmatpush1.bf16.msra.mxu0 0
        %911 = vmatprep.subr.bf16.mxu0 0
        %912 = vmatpush1.bf16.msra.mxu0 0
        %913 = vmatprep.mubr.bf16.mxu0 0
        %914 = vmatmul.mubr.bf16.gmra.mrb[0].mxu0 %v876
        %v915 = vpop.f32.mrb[0].mxu0
        %v916 = vadd.f32 0.0, %v915
        %v917 = vpop.f32.mrb[0].mxu0
        %v918 = vpop.f32.mrb[0].mxu0
        %v919 = vpop.f32.mrb[0].mxu0
        %920 = vdwg.mxu0
        %922 = vrot.lane.b32.xlu0 %v696, 8
        %v923 = vpop.permute.xlu0 %922
        %926 = vrot.lane.b32.xlu0 %v806, 16
        %v927 = vpop.permute.xlu0 %926
        %930 = vrot.lane.b32.xlu0 %v916, 24
        %v931 = vpop.permute.xlu0 %930
        %v933 = vsel %vm483, %v586, %v923
        %vm934 = vcmask 130048
        %v935 = vsel %vm934, %v933, %v927
        %vm936 = vcmask 195584
        %v937 = vsel %vm936, %v935, %v931
        %v938 = vpack.c.bf16 %v937, %v937
        %v939 = vld [vmem:[#allocation7] sm:$0xf]
        %v940 = vld [vmem:[#allocation7 + $0x4] sm:$0xf]
        %v941 = vld [vmem:[#allocation7 + $0x8] sm:$0xf]
        %v942 = vld [vmem:[#allocation7 + $0xc] sm:$0xf]
        %v947 = vunpack.c.l.b16 %v939
        %v948 = vunpack.c.l.b16 %v940
        %v949 = vunpack.c.l.b16 %v941
        %v950 = vunpack.c.l.b16 %v942
        %v951 = vpack.c.b16 %v948, %v947
        %v952 = vpack.c.b16 %v950, %v949
        %v956 = vsel %vm366, %v938, 0
        %958 = vmatprep.subr.bf16.mxu0 0
        %959 = vmatpush1.bf16.msra.mxu0 %v951
        %960 = vmatprep.subr.bf16.mxu0 0
        %961 = vmatpush1.bf16.msra.mxu0 %v952
        %962 = vmatprep.subr.bf16.mxu0 0
        %963 = vmatpush1.bf16.msra.mxu0 0
        %964 = vmatprep.subr.bf16.mxu0 0
        %965 = vmatpush1.bf16.msra.mxu0 0
        %966 = vmatprep.subr.bf16.mxu0 0
        %967 = vmatpush1.bf16.msra.mxu0 0
        %968 = vmatprep.subr.bf16.mxu0 0
        %969 = vmatpush1.bf16.msra.mxu0 0
        %970 = vmatprep.subr.bf16.mxu0 0
        %971 = vmatpush1.bf16.msra.mxu0 0
        %972 = vmatprep.subr.bf16.mxu0 0
        %973 = vmatpush1.bf16.msra.mxu0 0
        %974 = vmatprep.subr.bf16.mxu0 0
        %975 = vmatpush1.bf16.msra.mxu0 0
        %976 = vmatprep.subr.bf16.mxu0 0
        %977 = vmatpush1.bf16.msra.mxu0 0
        %978 = vmatprep.subr.bf16.mxu0 0
        %979 = vmatpush1.bf16.msra.mxu0 0
        %980 = vmatprep.subr.bf16.mxu0 0
        %981 = vmatpush1.bf16.msra.mxu0 0
        %982 = vmatprep.subr.bf16.mxu0 0
        %983 = vmatpush1.bf16.msra.mxu0 0
        %984 = vmatprep.subr.bf16.mxu0 0
        %985 = vmatpush1.bf16.msra.mxu0 0
        %986 = vmatprep.subr.bf16.mxu0 0
        %987 = vmatpush1.bf16.msra.mxu0 0
        %988 = vmatprep.subr.bf16.mxu0 0
        %989 = vmatpush1.bf16.msra.mxu0 0
        %990 = vmatprep.mubr.bf16.mxu0 0
        %991 = vmatmul.mubr.bf16.gmra.mrb[0].mxu0 %v956
        %v992 = vpop.f32.mrb[0].mxu0
        %v993 = vadd.f32 0.0, %v992
        %v994 = vpop.f32.mrb[0].mxu0
        %v995 = vpop.f32.mrb[0].mxu0
        %v996 = vpop.f32.mrb[0].mxu0
        %997 = vdwg.mxu0
        %v998 = vadd.f32 %v365, %v993
        %v999 = vld [vmem:[%s5] sm:$0x1]
        %v1001 = vlaneseq
        %v1002 = vshrl.u32 %v1001, 7
        %v1003 = vsub.s32 0, %v1002
        %v1004 = vrot.slane %v999, %v1003
        %v1006 = vadd.f32 %v998, %v1004
        %v1007 = vpack.c.bf16 %v1006, %v1006
        %vm1008 = vcmask 257024
        %1009 = vst.msk [vmem:[%s360] sm:$0xf] %vm1008, %v1007
        %s1010 = sand.u32 %s212, 1
        %s1011 = scalar_lea.sflag [#allocation4], %s1010
        %s1012 = sand.u32 %s212, 1
        %s1013 = smul.addr %s1012, 4
        %s1014 = scalar_lea.vmem [#allocation8], %s1013
        // Predicated region
        $region65: #{tpu_custom_call.1} parent=51 // pred_check
          %p1015 = pneg %p222
        $region66: #{tpu_custom_call.1} parent=51 // pred_check_branch
          %1017 = sbr.rel (%p1015) target = $region68
        $region67: #{tpu_custom_call.1} parent=51 // pred_region
          %s1019 = ssub.s32 64, 64
          %1020 = vsyncadd %s1011, %s1019
          %s1021 = smul.addr %s26, 64
          %s1022 = scalar_lea.hbm %s8, %s1021
          %s1024 = sshll.u32 %s1014, 4
          %s1025 = int_to_ptr.vmem [resolvable:$true] %s1024
          %1027 = dma.vmem_to_hbm [thread:$0]  %s1025, 64, %s1022, %s1011
        $region68: #{tpu_custom_call.1} parent=51 // pred_fallthru
          _
      $region52: #{tpu_custom_call.1} parent=5 // pred_fallthru
        _
      %p1028 = scmp.le.s32.totalorder 2, %s21
      // Predicated region
      $region69: #{tpu_custom_call.1} parent=5 // pred_check
        %p1029 = pneg %p1028
      $region70: #{tpu_custom_call.1} parent=5 // pred_check_branch
        %1031 = sbr.rel (%p1029) target = $region72
      $region71: #{tpu_custom_call.1} parent=5 // pred_region
        %s1032 = ssub.s32 %s21, 2
        // Predicated region
        $region73: #{tpu_custom_call.1} parent=71 // pred_check
          %p1033 = pneg %p228
        $region74: #{tpu_custom_call.1} parent=71 // pred_check_branch
          %1035 = sbr.rel (%p1033) target = $region76
        $region75: #{tpu_custom_call.1} parent=71 // pred_region
          %s1036 = sand.u32 %s213, 1
          %s1037 = scalar_lea.sflag [#allocation4], %s1036
          %s1038 = sand.u32 %s213, 1
          %s1039 = smul.addr %s1038, 4
          %s1040 = scalar_lea.vmem [#allocation8], %s1039
          %1041 = dma.done %s1037, 64
        $region76: #{tpu_custom_call.1} parent=71 // pred_fallthru
          _
      $region72: #{tpu_custom_call.1} parent=5 // pred_fallthru
        _
    $region6: #{tpu_custom_call.1} parent=1 // loop_footer
      %s25 = sadd.s32 1, %s21
    $region7: #{tpu_custom_call.1} parent=1 // loop_footer_branch
      %20 = sbr.rel target = $region3
    $region8: #{tpu_custom_call.1} parent=1 // loop_exit
      _
    %1042 = vsyncpa [#allocation3], 1
    %s1043 = scalar_lea.sflag [#allocation3], 1
    %1044 = vsyncpa %s1043, 1
    %1045 = vsyncpa [#allocation6], 1
    %1046 = vsyncpa [#allocation4], 1
    %s1047 = scalar_lea.sflag [#allocation4], 1
    %1048 = vsyncpa %s1047, 1

// kernel: tpu_custom_call.1
$region0: #{tpu_custom_call.1}
  #allocation0 [shape = 'u32[]', space=smem, size = 0x4, offset = 0x4, fixed_abs, tag = 'smem constant byte address 0x4 - core index']
  #allocation1 [shape = 'u32[144,128]{1,0:T(1,128)}', space=vmem, size = 0x12000, scoped, tag = 'internal scratch']
  %s0 = inlined_call_operand.hbm [shape: f32[2,8,32], index: 0, kind: input, shape index: {}]
  %s1 = inlined_call_operand.vmem [shape: f32[2,1,8], index: 1, kind: input, shape index: {}]
  %s2 = inlined_call_operand.hbm [shape: bf16[32,96], index: 2, kind: input, shape index: {}]
  %s3 = inlined_call_operand.vmem [shape: f32[1,96], index: 3, kind: input, shape index: {}]
  %s4 = inlined_call_operand.hbm [shape: bf16[32,32], index: 4, kind: input, shape index: {}]
  %s5 = inlined_call_operand.vmem [shape: f32[1,32], index: 5, kind: input, shape index: {}]
  %s6 = inlined_call_operand.vmem [shape: f32[1,32], index: 6, kind: input, shape index: {}]
  %s7 = inlined_call_operand.vmem [shape: f32[1,32], index: 7, kind: input, shape index: {}]
  %s8 = inlined_call_operand.hbm [shape: bf16[2,8,32], index: 8, kind: output, shape index: {}]
  %s9 = sld [smem:[#allocation0]]
  $region77: #{tpu_custom_call.1} parent=0
    _
  %s11 = ssub.s32 1, %s9
  %s12 = scalar_select 0, %s11, %s9
  $region1: #{tpu_custom_call.1} parent=0
    #allocation2 [shape = 'u8[8192]{0}', space=vmem, size = 0x2000, scoped, tag = 'input window, operand 0']
    #allocation3 [shape = 's32[2]{0}', space=sflag, size = 0x8, scoped, tag = 'scoped memory for tpu_custom_call.1']
    #allocation4 [shape = 's32[2]{0}', space=sflag, size = 0x8, scoped, tag = 'scoped memory for tpu_custom_call.1']
    #allocation5 [shape = 'u8[8192]{0}', space=vmem, size = 0x2000, scoped, tag = 'input window, operand 2, single buffered']
    #allocation6 [shape = 's32[1]{0}', space=sflag, size = 0x4, scoped, tag = 'scoped memory for tpu_custom_call.1']
    #allocation7 [shape = 'u8[8192]{0}', space=vmem, size = 0x2000, scoped, tag = 'input window, operand 4, single buffered']
    #allocation8 [shape = 'u8[4096]{0}', space=vmem, size = 0x1000, scoped, tag = 'output window, operand 0']
    %13 = vsyncpa [#allocation3], 0
    %s14 = scalar_lea.sflag [#allocation3], 1
    %15 = vsyncpa %s14, 0
    %16 = vsyncpa [#allocation6], 0
    %17 = vsyncpa [#allocation4], 0
    %s18 = scalar_lea.sflag [#allocation4], 1
    %19 = vsyncpa %s18, 0
    loop: start=0, step=1, limit=4
    $region2: #{tpu_custom_call.1} parent=1 // loop_pre_header
      _
    $region3: #{tpu_custom_call.1} parent=1 // loop_header
      %s21 = sphi 0, %s25
      %p22 = scmp.ge.s32.totalorder %s21, 4
      %s31 = sphi 0, %s33
      %s34 = sphi 0, %s31
      %s35 = sphi 0, %s34
      %s51 = sphi 0, %s35
      %s57 = sphi 0, %s59
      %s60 = sphi 0, %s57
      %s61 = sphi 0, %s60
      %s77 = sphi 0, %s61
      %s81 = sphi 0, %s81
      %s83 = sphi 0, %s81
      %s84 = sphi 0, %s83
      %s98 = sphi 0, %s84
      %s102 = sphi 0, %s102
      %s104 = sphi 0, %s102
      %s105 = sphi 0, %s104
      %s119 = sphi 0, %s105
      %s123 = sphi 0, %s123
      %s125 = sphi 0, %s123
      %s126 = sphi 0, %s125
      %s140 = sphi 0, %s126
      %s144 = sphi 0, %s144
      %s146 = sphi 0, %s144
      %s147 = sphi 0, %s146
      %s161 = sphi 0, %s147
      %s165 = sphi 0, %s165
      %s167 = sphi 0, %s165
      %s168 = sphi 0, %s167
      %s182 = sphi 0, %s168
      %s186 = sphi 0, %s186
      %s188 = sphi 0, %s186
      %s189 = sphi 0, %s188
      %s203 = sphi 0, %s189
      %s209 = sphi 0, %s211
      %s212 = sphi 0, %s209
      %s213 = sphi 0, %s212
      %s229 = sphi 0, %s213
    $region4: #{tpu_custom_call.1} parent=1 // loop_header_branch
      %24 = sbr.rel (%p22) target = $region8
    $region5: #{tpu_custom_call.1} parent=1 // loop_body
      %s26 = ssub.s32 %s21, 1
      %s27 = ssub.s32 %s21, 2
      %s28 = sadd.s32 %s21, 1
      %s29 = ssub.s32 %s21, %s28
      %p30 = scmp.eq.s32.totalorder %s29, 0
      %s32 = sadd.s32 %s31, 1
      %s33 = scalar_select %p30, %s31, %s32
      %p36 = pneg %p30
      %p37 = scmp.eq.s32.totalorder %s21, 1
      %p38 = por %p36, %p37
      %p39 = scmp.ne.s32.totalorder %s31, %s34
      %p40 = scmp.eq.s32.totalorder %s21, 0
      %p41 = por %p39, %p40
      %p42 = scmp.ne.s32.totalorder %s31, %s34
      %p43 = scmp.eq.s32.totalorder %s26, 1
      %p44 = por %p42, %p43
      %p45 = scmp.ne.s32.totalorder %s34, %s35
      %p46 = scmp.eq.s32.totalorder %s26, 0
      %p47 = por %p45, %p46
      %p48 = scmp.ne.s32.totalorder %s34, %s35
      %p49 = scmp.eq.s32.totalorder %s27, 1
      %p50 = por %p48, %p49
      %p52 = scmp.ne.s32.totalorder %s35, %s51
      %p53 = scmp.eq.s32.totalorder %s27, 0
      %p54 = por %p52, %p53
      %s55 = ssub.s32 %s21, %s28
      %p56 = scmp.eq.s32.totalorder %s55, 0
      %s58 = sadd.s32 %s57, 1
      %s59 = scalar_select %p56, %s57, %s58
      %p62 = pneg %p56
      %p63 = scmp.eq.s32.totalorder %s21, 1
      %p64 = por %p62, %p63
      %p65 = scmp.ne.s32.totalorder %s57, %s60
      %p66 = scmp.eq.s32.totalorder %s21, 0
      %p67 = por %p65, %p66
      %p68 = scmp.ne.s32.totalorder %s57, %s60
      %p69 = scmp.eq.s32.totalorder %s26, 1
      %p70 = por %p68, %p69
      %p71 = scmp.ne.s32.totalorder %s60, %s61
      %p72 = scmp.eq.s32.totalorder %s26, 0
      %p73 = por %p71, %p72
      %p74 = scmp.ne.s32.totalorder %s60, %s61
      %p75 = scmp.eq.s32.totalorder %s27, 1
      %p76 = por %p74, %p75
      %p78 = scmp.ne.s32.totalorder %s61, %s77
      %p79 = scmp.eq.s32.totalorder %s27, 0
      %p80 = por %p78, %p79
      %s82 = sadd.s32 %s81, 1
      %p85 = scmp.eq.s32.totalorder %s21, 1
      %p86 = scmp.ne.s32.totalorder %s81, %s83
      %p87 = scmp.eq.s32.totalorder %s21, 0
      %p88 = por %p86, %p87
      %p89 = scmp.ne.s32.totalorder %s81, %s83
      %p90 = scmp.eq.s32.totalorder %s26, 1
      %p91 = por %p89, %p90
      %p92 = scmp.ne.s32.totalorder %s83, %s84
      %p93 = scmp.eq.s32.totalorder %s26, 0
      %p94 = por %p92, %p93
      %p95 = scmp.ne.s32.totalorder %s83, %s84
      %p96 = scmp.eq.s32.totalorder %s27, 1
      %p97 = por %p95, %p96
      %p99 = scmp.ne.s32.totalorder %s84, %s98
      %p100 = scmp.eq.s32.totalorder %s27, 0
      %p101 = por %p99, %p100
      %s103 = sadd.s32 %s102, 1
      %p106 = scmp.eq.s32.totalorder %s21, 1
      %p107 = scmp.ne.s32.totalorder %s102, %s104
      %p108 = scmp.eq.s32.totalorder %s21, 0
      %p109 = por %p107, %p108
      %p110 = scmp.ne.s32.totalorder %s102, %s104
      %p111 = scmp.eq.s32.totalorder %s26, 1
      %p112 = por %p110, %p111
      %p113 = scmp.ne.s32.totalorder %s104, %s105
      %p114 = scmp.eq.s32.totalorder %s26, 0
      %p115 = por %p113, %p114
      %p116 = scmp.ne.s32.totalorder %s104, %s105
      %p117 = scmp.eq.s32.totalorder %s27, 1
      %p118 = por %p116, %p117
      %p120 = scmp.ne.s32.totalorder %s105, %s119
      %p121 = scmp.eq.s32.totalorder %s27, 0
      %p122 = por %p120, %p121
      %s124 = sadd.s32 %s123, 1
      %p127 = scmp.eq.s32.totalorder %s21, 1
      %p128 = scmp.ne.s32.totalorder %s123, %s125
      %p129 = scmp.eq.s32.totalorder %s21, 0
      %p130 = por %p128, %p129
      %p131 = scmp.ne.s32.totalorder %s123, %s125
      %p132 = scmp.eq.s32.totalorder %s26, 1
      %p133 = por %p131, %p132
      %p134 = scmp.ne.s32.totalorder %s125, %s126
      %p135 = scmp.eq.s32.totalorder %s26, 0
      %p136 = por %p134, %p135
      %p137 = scmp.ne.s32.totalorder %s125, %s126
      %p138 = scmp.eq.s32.totalorder %s27, 1
      %p139 = por %p137, %p138
      %p141 = scmp.ne.s32.totalorder %s126, %s140
      %p142 = scmp.eq.s32.totalorder %s27, 0
      %p143 = por %p141, %p142
      %s145 = sadd.s32 %s144, 1
      %p148 = scmp.eq.s32.totalorder %s21, 1
      %p149 = scmp.ne.s32.totalorder %s144, %s146
      %p150 = scmp.eq.s32.totalorder %s21, 0
      %p151 = por %p149, %p150
      %p152 = scmp.ne.s32.totalorder %s144, %s146
      %p153 = scmp.eq.s32.totalorder %s26, 1
      %p154 = por %p152, %p153
      %p155 = scmp.ne.s32.totalorder %s146, %s147
      %p156 = scmp.eq.s32.totalorder %s26, 0
      %p157 = por %p155, %p156
      %p158 = scmp.ne.s32.totalorder %s146, %s147
      %p159 = scmp.eq.s32.totalorder %s27, 1
      %p160 = por %p158, %p159
      %p162 = scmp.ne.s32.totalorder %s147, %s161
      %p163 = scmp.eq.s32.totalorder %s27, 0
      %p164 = por %p162, %p163
      %s166 = sadd.s32 %s165, 1
      %p169 = scmp.eq.s32.totalorder %s21, 1
      %p170 = scmp.ne.s32.totalorder %s165, %s167
      %p171 = scmp.eq.s32.totalorder %s21, 0
      %p172 = por %p170, %p171
      %p173 = scmp.ne.s32.totalorder %s165, %s167
      %p174 = scmp.eq.s32.totalorder %s26, 1
      %p175 = por %p173, %p174
      %p176 = scmp.ne.s32.totalorder %s167, %s168
      %p177 = scmp.eq.s32.totalorder %s26, 0
      %p178 = por %p176, %p177
      %p179 = scmp.ne.s32.totalorder %s167, %s168
      %p180 = scmp.eq.s32.totalorder %s27, 1
      %p181 = por %p179, %p180
      %p183 = scmp.ne.s32.totalorder %s168, %s182
      %p184 = scmp.eq.s32.totalorder %s27, 0
      %p185 = por %p183, %p184
      %s187 = sadd.s32 %s186, 1
      %p190 = scmp.eq.s32.totalorder %s21, 1
      %p191 = scmp.ne.s32.totalorder %s186, %s188
      %p192 = scmp.eq.s32.totalorder %s21, 0
      %p193 = por %p191, %p192
      %p194 = scmp.ne.s32.totalorder %s186, %s188
      %p195 = scmp.eq.s32.totalorder %s26, 1
      %p196 = por %p194, %p195
      %p197 = scmp.ne.s32.totalorder %s188, %s189
      %p198 = scmp.eq.s32.totalorder %s26, 0
      %p199 = por %p197, %p198
      %p200 = scmp.ne.s32.totalorder %s188, %s189
      %p201 = scmp.eq.s32.totalorder %s27, 1
      %p202 = por %p200, %p201
      %p204 = scmp.ne.s32.totalorder %s189, %s203
      %p205 = scmp.eq.s32.totalorder %s27, 0
      %p206 = por %p204, %p205
      %s207 = ssub.s32 %s21, %s28
      %p208 = scmp.eq.s32.totalorder %s207, 0
      %s210 = sadd.s32 %s209, 1
      %s211 = scalar_select %p208, %s209, %s210
      %p214 = pneg %p208
      %p215 = scmp.eq.s32.totalorder %s21, 1
      %p216 = por %p214, %p215
      %p217 = scmp.ne.s32.totalorder %s209, %s212
      %p218 = scmp.eq.s32.totalorder %s21, 0
      %p219 = por %p217, %p218
      %p220 = scmp.ne.s32.totalorder %s209, %s212
      %p221 = scmp.eq.s32.totalorder %s26, 1
      %p222 = por %p220, %p221
      %p223 = scmp.ne.s32.totalorder %s212, %s213
      %p224 = scmp.eq.s32.totalorder %s26, 0
      %p225 = por %p223, %p224
      %p226 = scmp.ne.s32.totalorder %s212, %s213
      %p227 = scmp.eq.s32.totalorder %s27, 1
      %p228 = por %p226, %p227
      %p230 = scmp.ne.s32.totalorder %s213, %s229
      %p231 = scmp.eq.s32.totalorder %s27, 0
      %p232 = por %p230, %p231
      %p233 = scmp.le.s32.totalorder 1, %s21
      %p234 = scmp.lt.s32.totalorder %s21, 3
      %p235 = pnand %p233, %p234
      %p236 = pneg %p235
      // Predicated region
      $region9: #{tpu_custom_call.1} parent=5 // pred_check
        _
      $region10: #{tpu_custom_call.1} parent=5 // pred_check_branch
        %238 = sbr.rel (%p235) target = $region12
      $region11: #{tpu_custom_call.1} parent=5 // pred_region
        %s239 = ssub.s32 %s21, 1
        // Predicated region
        $region13: #{tpu_custom_call.1} parent=11 // pred_check
          %p240 = pneg %p94
        $region14: #{tpu_custom_call.1} parent=11 // pred_check_branch
          %242 = sbr.rel (%p240) target = $region16
        $region15: #{tpu_custom_call.1} parent=11 // pred_region
          %s244 = ssub.s32 256, 256
          %245 = vsyncadd [#allocation6], %s244
          %s246 = sshll.u32 [#allocation5], 4
          %s247 = int_to_ptr.vmem [resolvable:$true] %s246
          %252 = dma.hbm_to_vmem [thread:$0]  %s2, 256, %s247, [#allocation6], 64, 64, 4
        $region16: #{tpu_custom_call.1} parent=11 // pred_fallthru
          _
        // Predicated region
        $region17: #{tpu_custom_call.1} parent=11 // pred_check
          %p253 = pneg %p115
        $region18: #{tpu_custom_call.1} parent=11 // pred_check_branch
          %255 = sbr.rel (%p253) target = $region20
        $region19: #{tpu_custom_call.1} parent=11 // pred_region
          _
        $region20: #{tpu_custom_call.1} parent=11 // pred_fallthru
          _
        // Predicated region
        $region21: #{tpu_custom_call.1} parent=11 // pred_check
          %p256 = pneg %p136
        $region22: #{tpu_custom_call.1} parent=11 // pred_check_branch
          %258 = sbr.rel (%p256) target = $region24
        $region23: #{tpu_custom_call.1} parent=11 // pred_region
          %s260 = ssub.s32 256, 256
          %261 = vsyncadd [#allocation6], %s260
          %s262 = sshll.u32 [#allocation7], 4
          %s263 = int_to_ptr.vmem [resolvable:$true] %s262
          %268 = dma.hbm_to_vmem [thread:$0]  %s4, 256, %s263, [#allocation6], 64, 64, 4
        $region24: #{tpu_custom_call.1} parent=11 // pred_fallthru
          _
        // Predicated region
        $region25: #{tpu_custom_call.1} parent=11 // pred_check
          %p269 = pneg %p157
        $region26: #{tpu_custom_call.1} parent=11 // pred_check_branch
          %271 = sbr.rel (%p269) target = $region28
        $region27: #{tpu_custom_call.1} parent=11 // pred_region
          _
        $region28: #{tpu_custom_call.1} parent=11 // pred_fallthru
          _
        // Predicated region
        $region29: #{tpu_custom_call.1} parent=11 // pred_check
          %p272 = pneg %p178
        $region30: #{tpu_custom_call.1} parent=11 // pred_check_branch
          %274 = sbr.rel (%p272) target = $region32
        $region31: #{tpu_custom_call.1} parent=11 // pred_region
          _
        $region32: #{tpu_custom_call.1} parent=11 // pred_fallthru
          _
        // Predicated region
        $region33: #{tpu_custom_call.1} parent=11 // pred_check
          %p275 = pneg %p199
        $region34: #{tpu_custom_call.1} parent=11 // pred_check_branch
          %277 = sbr.rel (%p275) target = $region36
        $region35: #{tpu_custom_call.1} parent=11 // pred_region
          _
        $region36: #{tpu_custom_call.1} parent=11 // pred_fallthru
          _
      $region12: #{tpu_custom_call.1} parent=5 // pred_fallthru
        _
      %p278 = scmp.lt.s32.totalorder %s21, 2
      // Predicated region
      $region37: #{tpu_custom_call.1} parent=5 // pred_check
        %p279 = pneg %p278
      $region38: #{tpu_custom_call.1} parent=5 // pred_check_branch
        %281 = sbr.rel (%p279) target = $region40
      $region39: #{tpu_custom_call.1} parent=5 // pred_region
        // Predicated region
        $region41: #{tpu_custom_call.1} parent=39 // pred_check
          %p282 = pneg %p41
        $region42: #{tpu_custom_call.1} parent=39 // pred_check_branch
          %284 = sbr.rel (%p282) target = $region44
        $region43: #{tpu_custom_call.1} parent=39 // pred_region
          %s285 = sand.u32 %s31, 1
          %s286 = scalar_lea.sflag [#allocation3], %s285
          %s287 = sand.u32 %s31, 1
          %s288 = smul.addr %s287, 8
          %s289 = scalar_lea.vmem [#allocation2], %s288
          %s291 = ssub.s32 128, 128
          %292 = vsyncadd %s286, %s291
          %s293 = smul.addr %s21, 128
          %s294 = scalar_lea.hbm %s0, %s293
          %s296 = sshll.u32 %s289, 4
          %s297 = int_to_ptr.vmem [resolvable:$true] %s296
          %299 = dma.hbm_to_vmem [thread:$0]  %s294, 128, %s297, %s286
        $region44: #{tpu_custom_call.1} parent=39 // pred_fallthru
          _
        // Predicated region
        $region45: #{tpu_custom_call.1} parent=39 // pred_check
          %p300 = pneg %p67
        $region46: #{tpu_custom_call.1} parent=39 // pred_check_branch
          %302 = sbr.rel (%p300) target = $region48
        $region47: #{tpu_custom_call.1} parent=39 // pred_region
          %p303 = scmp.lt.s32.totalorder %s21, 1
          %s304 = scalar_select %p303, %s21, 1
          %s305 = scalar_lea.vmem %s1, %s304
        $region48: #{tpu_custom_call.1} parent=39 // pred_fallthru
          _
      $region40: #{tpu_custom_call.1} parent=5 // pred_fallthru
        _
      %p306 = scmp.le.s32.totalorder 1, %s21
      %p307 = scmp.lt.s32.totalorder %s21, 3
      %p308 = pnand %p306, %p307
      %p309 = pneg %p308
      // Predicated region
      $region49: #{tpu_custom_call.1} parent=5 // pred_check
        _
      $region50: #{tpu_custom_call.1} parent=5 // pred_check_branch
        %311 = sbr.rel (%p308) target = $region52
      $region51: #{tpu_custom_call.1} parent=5 // pred_region
        %s312 = ssub.s32 %s21, 1
        %s313 = sand.u32 %s34, 1
        %s314 = scalar_lea.sflag [#allocation3], %s313
        %s315 = sand.u32 %s34, 1
        %s316 = smul.addr %s315, 8
        %s317 = scalar_lea.vmem [#allocation2], %s316
        // Predicated region
        $region53: #{tpu_custom_call.1} parent=51 // pred_check
          %p318 = pneg %p47
        $region54: #{tpu_custom_call.1} parent=51 // pred_check_branch
          %320 = sbr.rel (%p318) target = $region56
        $region55: #{tpu_custom_call.1} parent=51 // pred_region
          %321 = dma.done %s314, 128
        $region56: #{tpu_custom_call.1} parent=51 // pred_fallthru
          _
        // Predicated region
        $region57: #{tpu_custom_call.1} parent=51 // pred_check
          %p322 = pneg %p94
        $region58: #{tpu_custom_call.1} parent=51 // pred_check_branch
          %324 = sbr.rel (%p322) target = $region60
        $region59: #{tpu_custom_call.1} parent=51 // pred_region
          %325 = dma.done [#allocation6], 256
        $region60: #{tpu_custom_call.1} parent=51 // pred_fallthru
          _
        // Predicated region
        $region61: #{tpu_custom_call.1} parent=51 // pred_check
          %p326 = pneg %p136
        $region62: #{tpu_custom_call.1} parent=51 // pred_check_branch
          %328 = sbr.rel (%p326) target = $region64
        $region63: #{tpu_custom_call.1} parent=51 // pred_region
          %329 = dma.done [#allocation6], 256
        $region64: #{tpu_custom_call.1} parent=51 // pred_fallthru
          _
        %s330 = sand.u32 %s34, 1
        %s331 = scalar_lea.sflag [#allocation3], %s330
        %s332 = sand.u32 %s34, 1
        %s333 = smul.addr %s332, 8
        %s334 = scalar_lea.vmem [#allocation2], %s333
        %p335 = pneg %p47
        %p336 = pneg %p44
        %p337 = scmp.lt.s32.totalorder %s26, 1
        %s338 = scalar_select %p337, %s26, 1
        %s339 = scalar_lea.vmem %s1, %s338
        %p340 = pneg %p73
        %p341 = pneg %p70
        %p342 = pneg %p94
        %p343 = pneg %p91
        %p344 = pneg %p115
        %p345 = pneg %p112
        %p346 = pneg %p136
        %p347 = pneg %p133
        %p348 = pneg %p157
        %p349 = pneg %p154
        %p350 = pneg %p178
        %p351 = pneg %p175
        %p352 = pneg %p199
        %p353 = pneg %p196
        %p354 = pneg %p225
        %p355 = pneg %p222
        %s356 = sand.u32 %s212, 1
        %s357 = scalar_lea.sflag [#allocation4], %s356
        %s358 = sand.u32 %s212, 1
        %s359 = smul.addr %s358, 4
        %s360 = scalar_lea.vmem [#allocation8], %s359
        %p361 = scmp.lt.s32.totalorder %s26, 1
        %s362 = scalar_select %p361, %s26, 1
        %s363 = scalar_lea.vmem %s1, %s362
        %v365 = vld [vmem:[%s317] sm:$0xff]
        %vm366 = vcmask 261120
        %v367 = vsel %vm366, %v365, 0.0
        %368 = vadd.xlane.f32.xlu0 %v367
        %v369 = vpop.xlane.xlu0 %368
        %v370 = vrcp.pop 32.0
        %v371 = vmul.f32 %v369, %v370
        %v372 = vsub.f32 %v365, %v371
        %v373 = vmul.f32 %v372, %v372
        %v374 = vsel %vm366, %v373, 0.0
        %375 = vadd.xlane.f32.xlu0 %v374
        %v376 = vpop.xlane.xlu0 %375
        %v377 = vrcp.pop 31.0
        %v378 = vmul.f32 %v376, %v377
        %v379 = vld [vmem:[%s6] sm:$0x1]
        %v381 = vlaneseq
        %v382 = vshrl.u32 %v381, 7
        %v383 = vsub.s32 0, %v382
        %v384 = vrot.slane %v379, %v383
        %v386 = vmul.f32 %v384, %v372
        %v387 = vrsqrt.pop %v378
        %v388 = vmul.f32 %v378, %v387
        %vm389 = vcmp.eq.f32.partialorder %v378, inf
        %v390 = vsel %vm389, %v378, %v388
        %vm391 = vcmp.eq.f32.partialorder %v378, 0.0
        %v392 = vand.u32 %v378, 2147483648
        %v393 = vsel %vm391, %v392, %v390
        %v394 = vadd.f32 %v393, 1e-06
        %v395 = vrcp.pop %v394
        %v396 = vmul.f32 %v386, %v395
        %v397 = vld [vmem:[%s7] sm:$0x1]
        %v399 = vlaneseq
        %v400 = vshrl.u32 %v399, 7
        %v401 = vsub.s32 0, %v400
        %v402 = vrot.slane %v397, %v401
        %v404 = vadd.f32 %v396, %v402
        %v405 = vpack.c.bf16 %v404, %v404
        %v406 = vld [vmem:[#allocation5] sm:$0xf]
        %v407 = vld [vmem:[#allocation5 + $0x4] sm:$0xf]
        %v408 = vld [vmem:[#allocation5 + $0x8] sm:$0xf]
        %v409 = vld [vmem:[#allocation5 + $0xc] sm:$0xf]
        %v410 = vld [vmem:[%s3] sm:$0x1]
        %v412 = vlaneseq
        %v413 = vshrl.u32 %v412, 7
        %v414 = vsub.s32 0, %v413
        %v415 = vrot.slane %v410, %v414
        %v421 = vunpack.c.l.b16 %v406
        %v422 = vunpack.c.l.b16 %v407
        %v423 = vunpack.c.l.b16 %v408
        %v424 = vunpack.c.l.b16 %v409
        %v425 = vpack.c.b16 %v422, %v421
        %v426 = vpack.c.b16 %v424, %v423
        %v430 = vsel %vm366, %v405, 0
        %432 = vmatprep.subr.bf16.mxu0 0
        %433 = vmatpush1.bf16.msra.mxu0 %v425
        %434 = vmatprep.subr.bf16.mxu0 0
        %435 = vmatpush1.bf16.msra.mxu0 %v426
        %436 = vmatprep.subr.bf16.mxu0 0
        %437 = vmatpush1.bf16.msra.mxu0 0
        %438 = vmatprep.subr.bf16.mxu0 0
        %439 = vmatpush1.bf16.msra.mxu0 0
        %440 = vmatprep.subr.bf16.mxu0 0
        %441 = vmatpush1.bf16.msra.mxu0 0
        %442 = vmatprep.subr.bf16.mxu0 0
        %443 = vmatpush1.bf16.msra.mxu0 0
        %444 = vmatprep.subr.bf16.mxu0 0
        %445 = vmatpush1.bf16.msra.mxu0 0
        %446 = vmatprep.subr.bf16.mxu0 0
        %447 = vmatpush1.bf16.msra.mxu0 0
        %448 = vmatprep.subr.bf16.mxu0 0
        %449 = vmatpush1.bf16.msra.mxu0 0
        %450 = vmatprep.subr.bf16.mxu0 0
        %451 = vmatpush1.bf16.msra.mxu0 0
        %452 = vmatprep.subr.bf16.mxu0 0
        %453 = vmatpush1.bf16.msra.mxu0 0
        %454 = vmatprep.subr.bf16.mxu0 0
        %455 = vmatpush1.bf16.msra.mxu0 0
        %456 = vmatprep.subr.bf16.mxu0 0
        %457 = vmatpush1.bf16.msra.mxu0 0
        %458 = vmatprep.subr.bf16.mxu0 0
        %459 = vmatpush1.bf16.msra.mxu0 0
        %460 = vmatprep.subr.bf16.mxu0 0
        %461 = vmatpush1.bf16.msra.mxu0 0
        %462 = vmatprep.subr.bf16.mxu0 0
        %463 = vmatpush1.bf16.msra.mxu0 0
        %464 = vmatprep.mubr.bf16.mxu0 0
        %465 = vmatmul.mubr.bf16.gmra.mrb[0].mxu0 %v430
        %v466 = vpop.f32.mrb[0].mxu0
        %v467 = vadd.f32 %v415, %v466
        %v468 = vpop.f32.mrb[0].mxu0
        %v469 = vpop.f32.mrb[0].mxu0
        %v470 = vpop.f32.mrb[0].mxu0
        %471 = vdwg.mxu0
        %v472 = vld [vmem:[%s363] sm:$0x1]
        %v474 = vlaneseq
        %v475 = vshrl.u32 %v474, 7
        %v476 = vsub.s32 0, %v475
        %v477 = vrot.slane %v472, %v476
        %v479 = vpack.c.bf16 %v467, %v467
        %481 = vrot.lane.b32.xlu0 %v479, 96
        %v482 = vpop.permute.xlu0 %481
        %vm483 = vcmask 64512
        %v485 = vsel %vm483, %v479, 0
        %v488 = vsel %vm483, %v482, 0
        %490 = vmatprep.subr.bf16.mxu0 0
        %491 = vmatpush1.bf16.xpose.msra.mxu0 %v488
        %492 = vmatprep.subr.bf16.mxu0 0
        %493 = vmatpush1.bf16.xpose.msra.mxu0 0
        %494 = vmatprep.subr.bf16.mxu0 0
        %495 = vmatpush1.bf16.xpose.msra.mxu0 0
        %496 = vmatprep.subr.bf16.mxu0 0
        %497 = vmatpush1.bf16.xpose.msra.mxu0 0
        %498 = vmatprep.subr.bf16.mxu0 0
        %499 = vmatpush1.bf16.xpose.msra.mxu0 0
        %500 = vmatprep.subr.bf16.mxu0 0
        %501 = vmatpush1.bf16.xpose.msra.mxu0 0
        %502 = vmatprep.subr.bf16.mxu0 0
        %503 = vmatpush1.bf16.xpose.msra.mxu0 0
        %504 = vmatprep.subr.bf16.mxu0 0
        %505 = vmatpush1.bf16.xpose.msra.mxu0 0
        %506 = vmatprep.subr.bf16.mxu0 0
        %507 = vmatpush1.bf16.xpose.msra.mxu0 0
        %508 = vmatprep.subr.bf16.mxu0 0
        %509 = vmatpush1.bf16.xpose.msra.mxu0 0
        %510 = vmatprep.subr.bf16.mxu0 0
        %511 = vmatpush1.bf16.xpose.msra.mxu0 0
        %512 = vmatprep.subr.bf16.mxu0 0
        %513 = vmatpush1.bf16.xpose.msra.mxu0 0
        %514 = vmatprep.subr.bf16.mxu0 0
        %515 = vmatpush1.bf16.xpose.msra.mxu0 0
        %516 = vmatprep.subr.bf16.mxu0 0
        %517 = vmatpush1.bf16.xpose.msra.mxu0 0
        %518 = vmatprep.subr.bf16.mxu0 0
        %519 = vmatpush1.bf16.xpose.msra.mxu0 0
        %520 = vmatprep.subr.bf16.mxu0 0
        %521 = vmatpush1.bf16.xpose.msra.mxu0 0
        %522 = vmatprep.mubr.bf16.mxu0 0
        %523 = vmatmul.mubr.bf16.gmra.mrb[0].mxu0 %v485
        %v524 = vpop.f32.mrb[0].mxu0
        %v525 = vadd.f32 %v477, %v524
        %v526 = vpop.f32.mrb[0].mxu0
        %v527 = vpop.f32.mrb[0].mxu0
        %v528 = vpop.f32.mrb[0].mxu0
        %529 = vdwg.mxu0
        %v530 = vsel %vm483, %v525, -inf
        %531 = vmax.xlane.f32.xlu0 %v530
        %v532 = vpop.xlane.xlu0 %531
        %v533 = vsub.f32 %v525, %v532
        %v534 = vmul.f32 %v533, 1.442695
        %v535 = vpow.pop %v534
        %v536 = vsel %vm483, %v535, 0.0
        %537 = vadd.xlane.f32.xlu0 %v536
        %v538 = vpop.xlane.xlu0 %537
        %v539 = vrcp.pop %v538
        %v540 = vmul.f32 %v535, %v539
        %v541 = vpack.c.bf16 %v540, %v540
        %542 = vrot.lane.b32.xlu0 %v479, 64
        %v543 = vpop.permute.xlu0 %542
        %v545 = vsel %vm483, %v541, 0
        %vm547 = vcmask 1043456
        %v549 = vsel %vm547, %v543, 0
        %551 = vmatprep.subr.bf16.mxu0 0
        %552 = vmatpush1.bf16.msra.mxu0 %v549
        %553 = vmatprep.subr.bf16.mxu0 0
        %554 = vmatpush1.bf16.msra.mxu0 0
        %555 = vmatprep.subr.bf16.mxu0 0
        %556 = vmatpush1.bf16.msra.mxu0 0
        %557 = vmatprep.subr.bf16.mxu0 0
        %558 = vmatpush1.bf16.msra.mxu0 0
        %559 = vmatprep.subr.bf16.mxu0 0
        %560 = vmatpush1.bf16.msra.mxu0 0
        %561 = vmatprep.subr.bf16.mxu0 0
        %562 = vmatpush1.bf16.msra.mxu0 0
        %563 = vmatprep.subr.bf16.mxu0 0
        %564 = vmatpush1.bf16.msra.mxu0 0
        %565 = vmatprep.subr.bf16.mxu0 0
        %566 = vmatpush1.bf16.msra.mxu0 0
        %567 = vmatprep.subr.bf16.mxu0 0
        %568 = vmatpush1.bf16.msra.mxu0 0
        %569 = vmatprep.subr.bf16.mxu0 0
        %570 = vmatpush1.bf16.msra.mxu0 0
        %571 = vmatprep.subr.bf16.mxu0 0
        %572 = vmatpush1.bf16.msra.mxu0 0
        %573 = vmatprep.subr.bf16.mxu0 0
        %574 = vmatpush1.bf16.msra.mxu0 0
        %575 = vmatprep.subr.bf16.mxu0 0
        %576 = vmatpush1.bf16.msra.mxu0 0
        %577 = vmatprep.subr.bf16.mxu0 0
        %578 = vmatpush1.bf16.msra.mxu0 0
        %579 = vmatprep.subr.bf16.mxu0 0
        %580 = vmatpush1.bf16.msra.mxu0 0
        %581 = vmatprep.subr.bf16.mxu0 0
        %582 = vmatpush1.bf16.msra.mxu0 0
        %583 = vmatprep.mubr.bf16.mxu0 0
        %584 = vmatmul.mubr.bf16.gmra.mrb[0].mxu0 %v545
        %v585 = vpop.f32.mrb[0].mxu0
        %v586 = vadd.f32 0.0, %v585
        %v587 = vpop.f32.mrb[0].mxu0
        %v588 = vpop.f32.mrb[0].mxu0
        %v589 = vpop.f32.mrb[0].mxu0
        %590 = vdwg.mxu0
        %591 = vrot.lane.b32.xlu0 %v479, 120
        %v592 = vpop.permute.xlu0 %591
        %593 = vrot.lane.b32.xlu0 %v479, 88
        %v594 = vpop.permute.xlu0 %593
        %v596 = vsel %vm483, %v592, 0
        %v599 = vsel %vm483, %v594, 0
        %601 = vmatprep.subr.bf16.mxu0 0
        %602 = vmatpush1.bf16.xpose.msra.mxu0 %v599
        %603 = vmatprep.subr.bf16.mxu0 0
        %604 = vmatpush1.bf16.xpose.msra.mxu0 0
        %605 = vmatprep.subr.bf16.mxu0 0
        %606 = vmatpush1.bf16.xpose.msra.mxu0 0
        %607 = vmatprep.subr.bf16.mxu0 0
        %608 = vmatpush1.bf16.xpose.msra.mxu0 0
        %609 = vmatprep.subr.bf16.mxu0 0
        %610 = vmatpush1.bf16.xpose.msra.mxu0 0
        %611 = vmatprep.subr.bf16.mxu0 0
        %612 = vmatpush1.bf16.xpose.msra.mxu0 0
        %613 = vmatprep.subr.bf16.mxu0 0
        %614 = vmatpush1.bf16.xpose.msra.mxu0 0
        %615 = vmatprep.subr.bf16.mxu0 0
        %616 = vmatpush1.bf16.xpose.msra.mxu0 0
        %617 = vmatprep.subr.bf16.mxu0 0
        %618 = vmatpush1.bf16.xpose.msra.mxu0 0
        %619 = vmatprep.subr.bf16.mxu0 0
        %620 = vmatpush1.bf16.xpose.msra.mxu0 0
        %621 = vmatprep.subr.bf16.mxu0 0
        %622 = vmatpush1.bf16.xpose.msra.mxu0 0
        %623 = vmatprep.subr.bf16.mxu0 0
        %624 = vmatpush1.bf16.xpose.msra.mxu0 0
        %625 = vmatprep.subr.bf16.mxu0 0
        %626 = vmatpush1.bf16.xpose.msra.mxu0 0
        %627 = vmatprep.subr.bf16.mxu0 0
        %628 = vmatpush1.bf16.xpose.msra.mxu0 0
        %629 = vmatprep.subr.bf16.mxu0 0
        %630 = vmatpush1.bf16.xpose.msra.mxu0 0
        %631 = vmatprep.subr.bf16.mxu0 0
        %632 = vmatpush1.bf16.xpose.msra.mxu0 0
        %633 = vmatprep.mubr.bf16.mxu0 0
        %634 = vmatmul.mubr.bf16.gmra.mrb[0].mxu0 %v596
        %v635 = vpop.f32.mrb[0].mxu0
        %v636 = vadd.f32 %v477, %v635
        %v637 = vpop.f32.mrb[0].mxu0
        %v638 = vpop.f32.mrb[0].mxu0
        %v639 = vpop.f32.mrb[0].mxu0
        %640 = vdwg.mxu0
        %v641 = vsel %vm483, %v636, -inf
        %642 = vmax.xlane.f32.xlu0 %v641
        %v643 = vpop.xlane.xlu0 %642
        %v644 = vsub.f32 %v636, %v643
        %v645 = vmul.f32 %v644, 1.442695
        %v646 = vpow.pop %v645
        %v647 = vsel %vm483, %v646, 0.0
        %648 = vadd.xlane.f32.xlu0 %v647
        %v649 = vpop.xlane.xlu0 %648
        %v650 = vrcp.pop %v649
        %v651 = vmul.f32 %v646, %v650
        %v652 = vpack.c.bf16 %v651, %v651
        %653 = vrot.lane.b32.xlu0 %v479, 56
        %v654 = vpop.permute.xlu0 %653
        %v656 = vsel %vm483, %v652, 0
        %v659 = vsel %vm547, %v654, 0
        %661 = vmatprep.subr.bf16.mxu0 0
        %662 = vmatpush1.bf16.msra.mxu0 %v659
        %663 = vmatprep.subr.bf16.mxu0 0
        %664 = vmatpush1.bf16.msra.mxu0 0
        %665 = vmatprep.subr.bf16.mxu0 0
        %666 = vmatpush1.bf16.msra.mxu0 0
        %667 = vmatprep.subr.bf16.mxu0 0
        %668 = vmatpush1.bf16.msra.mxu0 0
        %669 = vmatprep.subr.bf16.mxu0 0
        %670 = vmatpush1.bf16.msra.mxu0 0
        %671 = vmatprep.subr.bf16.mxu0 0
        %672 = vmatpush1.bf16.msra.mxu0 0
        %673 = vmatprep.subr.bf16.mxu0 0
        %674 = vmatpush1.bf16.msra.mxu0 0
        %675 = vmatprep.subr.bf16.mxu0 0
        %676 = vmatpush1.bf16.msra.mxu0 0
        %677 = vmatprep.subr.bf16.mxu0 0
        %678 = vmatpush1.bf16.msra.mxu0 0
        %679 = vmatprep.subr.bf16.mxu0 0
        %680 = vmatpush1.bf16.msra.mxu0 0
        %681 = vmatprep.subr.bf16.mxu0 0
        %682 = vmatpush1.bf16.msra.mxu0 0
        %683 = vmatprep.subr.bf16.mxu0 0
        %684 = vmatpush1.bf16.msra.mxu0 0
        %685 = vmatprep.subr.bf16.mxu0 0
        %686 = vmatpush1.bf16.msra.mxu0 0
        %687 = vmatprep.subr.bf16.mxu0 0
        %688 = vmatpush1.bf16.msra.mxu0 0
        %689 = vmatprep.subr.bf16.mxu0 0
        %690 = vmatpush1.bf16.msra.mxu0 0
        %691 = vmatprep.subr.bf16.mxu0 0
        %692 = vmatpush1.bf16.msra.mxu0 0
        %693 = vmatprep.mubr.bf16.mxu0 0
        %694 = vmatmul.mubr.bf16.gmra.mrb[0].mxu0 %v656
        %v695 = vpop.f32.mrb[0].mxu0
        %v696 = vadd.f32 0.0, %v695
        %v697 = vpop.f32.mrb[0].mxu0
        %v698 = vpop.f32.mrb[0].mxu0
        %v699 = vpop.f32.mrb[0].mxu0
        %700 = vdwg.mxu0
        %701 = vrot.lane.b32.xlu0 %v479, 112
        %v702 = vpop.permute.xlu0 %701
        %703 = vrot.lane.b32.xlu0 %v479, 80
        %v704 = vpop.permute.xlu0 %703
        %v706 = vsel %vm483, %v702, 0
        %v709 = vsel %vm483, %v704, 0
        %711 = vmatprep.subr.bf16.mxu0 0
        %712 = vmatpush1.bf16.xpose.msra.mxu0 %v709
        %713 = vmatprep.subr.bf16.mxu0 0
        %714 = vmatpush1.bf16.xpose.msra.mxu0 0
        %715 = vmatprep.subr.bf16.mxu0 0
        %716 = vmatpush1.bf16.xpose.msra.mxu0 0
        %717 = vmatprep.subr.bf16.mxu0 0
        %718 = vmatpush1.bf16.xpose.msra.mxu0 0
        %719 = vmatprep.subr.bf16.mxu0 0
        %720 = vmatpush1.bf16.xpose.msra.mxu0 0
        %721 = vmatprep.subr.bf16.mxu0 0
        %722 = vmatpush1.bf16.xpose.msra.mxu0 0
        %723 = vmatprep.subr.bf16.mxu0 0
        %724 = vmatpush1.bf16.xpose.msra.mxu0 0
        %725 = vmatprep.subr.bf16.mxu0 0
        %726 = vmatpush1.bf16.xpose.msra.mxu0 0
        %727 = vmatprep.subr.bf16.mxu0 0
        %728 = vmatpush1.bf16.xpose.msra.mxu0 0
        %729 = vmatprep.subr.bf16.mxu0 0
        %730 = vmatpush1.bf16.xpose.msra.mxu0 0
        %731 = vmatprep.subr.bf16.mxu0 0
        %732 = vmatpush1.bf16.xpose.msra.mxu0 0
        %733 = vmatprep.subr.bf16.mxu0 0
        %734 = vmatpush1.bf16.xpose.msra.mxu0 0
        %735 = vmatprep.subr.bf16.mxu0 0
        %736 = vmatpush1.bf16.xpose.msra.mxu0 0
        %737 = vmatprep.subr.bf16.mxu0 0
        %738 = vmatpush1.bf16.xpose.msra.mxu0 0
        %739 = vmatprep.subr.bf16.mxu0 0
        %740 = vmatpush1.bf16.xpose.msra.mxu0 0
        %741 = vmatprep.subr.bf16.mxu0 0
        %742 = vmatpush1.bf16.xpose.msra.mxu0 0
        %743 = vmatprep.mubr.bf16.mxu0 0
        %744 = vmatmul.mubr.bf16.gmra.mrb[0].mxu0 %v706
        %v745 = vpop.f32.mrb[0].mxu0
        %v746 = vadd.f32 %v477, %v745
        %v747 = vpop.f32.mrb[0].mxu0
        %v748 = vpop.f32.mrb[0].mxu0
        %v749 = vpop.f32.mrb[0].mxu0
        %750 = vdwg.mxu0
        %v751 = vsel %vm483, %v746, -inf
        %752 = vmax.xlane.f32.xlu0 %v751
        %v753 = vpop.xlane.xlu0 %752
        %v754 = vsub.f32 %v746, %v753
        %v755 = vmul.f32 %v754, 1.442695
        %v756 = vpow.pop %v755
        %v757 = vsel %vm483, %v756, 0.0
        %758 = vadd.xlane.f32.xlu0 %v757
        %v759 = vpop.xlane.xlu0 %758
        %v760 = vrcp.pop %v759
        %v761 = vmul.f32 %v756, %v760
        %v762 = vpack.c.bf16 %v761, %v761
        %763 = vrot.lane.b32.xlu0 %v479, 48
        %v764 = vpop.permute.xlu0 %763
        %v766 = vsel %vm483, %v762, 0
        %v769 = vsel %vm547, %v764, 0
        %771 = vmatprep.subr.bf16.mxu0 0
        %772 = vmatpush1.bf16.msra.mxu0 %v769
        %773 = vmatprep.subr.bf16.mxu0 0
        %774 = vmatpush1.bf16.msra.mxu0 0
        %775 = vmatprep.subr.bf16.mxu0 0
        %776 = vmatpush1.bf16.msra.mxu0 0
        %777 = vmatprep.subr.bf16.mxu0 0
        %778 = vmatpush1.bf16.msra.mxu0 0
        %779 = vmatprep.subr.bf16.mxu0 0
        %780 = vmatpush1.bf16.msra.mxu0 0
        %781 = vmatprep.subr.bf16.mxu0 0
        %782 = vmatpush1.bf16.msra.mxu0 0
        %783 = vmatprep.subr.bf16.mxu0 0
        %784 = vmatpush1.bf16.msra.mxu0 0
        %785 = vmatprep.subr.bf16.mxu0 0
        %786 = vmatpush1.bf16.msra.mxu0 0
        %787 = vmatprep.subr.bf16.mxu0 0
        %788 = vmatpush1.bf16.msra.mxu0 0
        %789 = vmatprep.subr.bf16.mxu0 0
        %790 = vmatpush1.bf16.msra.mxu0 0
        %791 = vmatprep.subr.bf16.mxu0 0
        %792 = vmatpush1.bf16.msra.mxu0 0
        %793 = vmatprep.subr.bf16.mxu0 0
        %794 = vmatpush1.bf16.msra.mxu0 0
        %795 = vmatprep.subr.bf16.mxu0 0
        %796 = vmatpush1.bf16.msra.mxu0 0
        %797 = vmatprep.subr.bf16.mxu0 0
        %798 = vmatpush1.bf16.msra.mxu0 0
        %799 = vmatprep.subr.bf16.mxu0 0
        %800 = vmatpush1.bf16.msra.mxu0 0
        %801 = vmatprep.subr.bf16.mxu0 0
        %802 = vmatpush1.bf16.msra.mxu0 0
        %803 = vmatprep.mubr.bf16.mxu0 0
        %804 = vmatmul.mubr.bf16.gmra.mrb[0].mxu0 %v766
        %v805 = vpop.f32.mrb[0].mxu0
        %v806 = vadd.f32 0.0, %v805
        %v807 = vpop.f32.mrb[0].mxu0
        %v808 = vpop.f32.mrb[0].mxu0
        %v809 = vpop.f32.mrb[0].mxu0
        %810 = vdwg.mxu0
        %811 = vrot.lane.b32.xlu0 %v479, 104
        %v812 = vpop.permute.xlu0 %811
        %813 = vrot.lane.b32.xlu0 %v479, 72
        %v814 = vpop.permute.xlu0 %813
        %v816 = vsel %vm483, %v812, 0
        %v819 = vsel %vm483, %v814, 0
        %821 = vmatprep.subr.bf16.mxu0 0
        %822 = vmatpush1.bf16.xpose.msra.mxu0 %v819
        %823 = vmatprep.subr.bf16.mxu0 0
        %824 = vmatpush1.bf16.xpose.msra.mxu0 0
        %825 = vmatprep.subr.bf16.mxu0 0
        %826 = vmatpush1.bf16.xpose.msra.mxu0 0
        %827 = vmatprep.subr.bf16.mxu0 0
        %828 = vmatpush1.bf16.xpose.msra.mxu0 0
        %829 = vmatprep.subr.bf16.mxu0 0
        %830 = vmatpush1.bf16.xpose.msra.mxu0 0
        %831 = vmatprep.subr.bf16.mxu0 0
        %832 = vmatpush1.bf16.xpose.msra.mxu0 0
        %833 = vmatprep.subr.bf16.mxu0 0
        %834 = vmatpush1.bf16.xpose.msra.mxu0 0
        %835 = vmatprep.subr.bf16.mxu0 0
        %836 = vmatpush1.bf16.xpose.msra.mxu0 0
        %837 = vmatprep.subr.bf16.mxu0 0
        %838 = vmatpush1.bf16.xpose.msra.mxu0 0
        %839 = vmatprep.subr.bf16.mxu0 0
        %840 = vmatpush1.bf16.xpose.msra.mxu0 0
        %841 = vmatprep.subr.bf16.mxu0 0
        %842 = vmatpush1.bf16.xpose.msra.mxu0 0
        %843 = vmatprep.subr.bf16.mxu0 0
        %844 = vmatpush1.bf16.xpose.msra.mxu0 0
        %845 = vmatprep.subr.bf16.mxu0 0
        %846 = vmatpush1.bf16.xpose.msra.mxu0 0
        %847 = vmatprep.subr.bf16.mxu0 0
        %848 = vmatpush1.bf16.xpose.msra.mxu0 0
        %849 = vmatprep.subr.bf16.mxu0 0
        %850 = vmatpush1.bf16.xpose.msra.mxu0 0
        %851 = vmatprep.subr.bf16.mxu0 0
        %852 = vmatpush1.bf16.xpose.msra.mxu0 0
        %853 = vmatprep.mubr.bf16.mxu0 0
        %854 = vmatmul.mubr.bf16.gmra.mrb[0].mxu0 %v816
        %v855 = vpop.f32.mrb[0].mxu0
        %v856 = vadd.f32 %v477, %v855
        %v857 = vpop.f32.mrb[0].mxu0
        %v858 = vpop.f32.mrb[0].mxu0
        %v859 = vpop.f32.mrb[0].mxu0
        %860 = vdwg.mxu0
        %v861 = vsel %vm483, %v856, -inf
        %862 = vmax.xlane.f32.xlu0 %v861
        %v863 = vpop.xlane.xlu0 %862
        %v864 = vsub.f32 %v856, %v863
        %v865 = vmul.f32 %v864, 1.442695
        %v866 = vpow.pop %v865
        %v867 = vsel %vm483, %v866, 0.0
        %868 = vadd.xlane.f32.xlu0 %v867
        %v869 = vpop.xlane.xlu0 %868
        %v870 = vrcp.pop %v869
        %v871 = vmul.f32 %v866, %v870
        %v872 = vpack.c.bf16 %v871, %v871
        %873 = vrot.lane.b32.xlu0 %v479, 40
        %v874 = vpop.permute.xlu0 %873
        %v876 = vsel %vm483, %v872, 0
        %v879 = vsel %vm547, %v874, 0
        %881 = vmatprep.subr.bf16.mxu0 0
        %882 = vmatpush1.bf16.msra.mxu0 %v879
        %883 = vmatprep.subr.bf16.mxu0 0
        %884 = vmatpush1.bf16.msra.mxu0 0
        %885 = vmatprep.subr.bf16.mxu0 0
        %886 = vmatpush1.bf16.msra.mxu0 0
        %887 = vmatprep.subr.bf16.mxu0 0
        %888 = vmatpush1.bf16.msra.mxu0 0
        %889 = vmatprep.subr.bf16.mxu0 0
        %890 = vmatpush1.bf16.msra.mxu0 0
        %891 = vmatprep.subr.bf16.mxu0 0
        %892 = vmatpush1.bf16.msra.mxu0 0
        %893 = vmatprep.subr.bf16.mxu0 0
        %894 = vmatpush1.bf16.msra.mxu0 0
        %895 = vmatprep.subr.bf16.mxu0 0
        %896 = vmatpush1.bf16.msra.mxu0 0
        %897 = vmatprep.subr.bf16.mxu0 0
        %898 = vmatpush1.bf16.msra.mxu0 0
        %899 = vmatprep.subr.bf16.mxu0 0
        %900 = vmatpush1.bf16.msra.mxu0 0
        %901 = vmatprep.subr.bf16.mxu0 0
        %902 = vmatpush1.bf16.msra.mxu0 0
        %903 = vmatprep.subr.bf16.mxu0 0
        %904 = vmatpush1.bf16.msra.mxu0 0
        %905 = vmatprep.subr.bf16.mxu0 0
        %906 = vmatpush1.bf16.msra.mxu0 0
        %907 = vmatprep.subr.bf16.mxu0 0
        %908 = vmatpush1.bf16.msra.mxu0 0
        %909 = vmatprep.subr.bf16.mxu0 0
        %910 = vmatpush1.bf16.msra.mxu0 0
        %911 = vmatprep.subr.bf16.mxu0 0
        %912 = vmatpush1.bf16.msra.mxu0 0
        %913 = vmatprep.mubr.bf16.mxu0 0
        %914 = vmatmul.mubr.bf16.gmra.mrb[0].mxu0 %v876
        %v915 = vpop.f32.mrb[0].mxu0
        %v916 = vadd.f32 0.0, %v915
        %v917 = vpop.f32.mrb[0].mxu0
        %v918 = vpop.f32.mrb[0].mxu0
        %v919 = vpop.f32.mrb[0].mxu0
        %920 = vdwg.mxu0
        %922 = vrot.lane.b32.xlu0 %v696, 8
        %v923 = vpop.permute.xlu0 %922
        %926 = vrot.lane.b32.xlu0 %v806, 16
        %v927 = vpop.permute.xlu0 %926
        %930 = vrot.lane.b32.xlu0 %v916, 24
        %v931 = vpop.permute.xlu0 %930
        %v933 = vsel %vm483, %v586, %v923
        %vm934 = vcmask 130048
        %v935 = vsel %vm934, %v933, %v927
        %vm936 = vcmask 195584
        %v937 = vsel %vm936, %v935, %v931
        %v938 = vpack.c.bf16 %v937, %v937
        %v939 = vld [vmem:[#allocation7] sm:$0xf]
        %v940 = vld [vmem:[#allocation7 + $0x4] sm:$0xf]
        %v941 = vld [vmem:[#allocation7 + $0x8] sm:$0xf]
        %v942 = vld [vmem:[#allocation7 + $0xc] sm:$0xf]
        %v947 = vunpack.c.l.b16 %v939
        %v948 = vunpack.c.l.b16 %v940
        %v949 = vunpack.c.l.b16 %v941
        %v950 = vunpack.c.l.b16 %v942
        %v951 = vpack.c.b16 %v948, %v947
        %v952 = vpack.c.b16 %v950, %v949
        %v956 = vsel %vm366, %v938, 0
        %958 = vmatprep.subr.bf16.mxu0 0
        %959 = vmatpush1.bf16.msra.mxu0 %v951
        %960 = vmatprep.subr.bf16.mxu0 0
        %961 = vmatpush1.bf16.msra.mxu0 %v952
        %962 = vmatprep.subr.bf16.mxu0 0
        %963 = vmatpush1.bf16.msra.mxu0 0
        %964 = vmatprep.subr.bf16.mxu0 0
        %965 = vmatpush1.bf16.msra.mxu0 0
        %966 = vmatprep.subr.bf16.mxu0 0
        %967 = vmatpush1.bf16.msra.mxu0 0
        %968 = vmatprep.subr.bf16.mxu0 0
        %969 = vmatpush1.bf16.msra.mxu0 0
        %970 = vmatprep.subr.bf16.mxu0 0
        %971 = vmatpush1.bf16.msra.mxu0 0
        %972 = vmatprep.subr.bf16.mxu0 0
        %973 = vmatpush1.bf16.msra.mxu0 0
        %974 = vmatprep.subr.bf16.mxu0 0
        %975 = vmatpush1.bf16.msra.mxu0 0
        %976 = vmatprep.subr.bf16.mxu0 0
        %977 = vmatpush1.bf16.msra.mxu0 0
        %978 = vmatprep.subr.bf16.mxu0 0
        %979 = vmatpush1.bf16.msra.mxu0 0
        %980 = vmatprep.subr.bf16.mxu0 0
        %981 = vmatpush1.bf16.msra.mxu0 0
        %982 = vmatprep.subr.bf16.mxu0 0
        %983 = vmatpush1.bf16.msra.mxu0 0
        %984 = vmatprep.subr.bf16.mxu0 0
        %985 = vmatpush1.bf16.msra.mxu0 0
        %986 = vmatprep.subr.bf16.mxu0 0
        %987 = vmatpush1.bf16.msra.mxu0 0
        %988 = vmatprep.subr.bf16.mxu0 0
        %989 = vmatpush1.bf16.msra.mxu0 0
        %990 = vmatprep.mubr.bf16.mxu0 0
        %991 = vmatmul.mubr.bf16.gmra.mrb[0].mxu0 %v956
        %v992 = vpop.f32.mrb[0].mxu0
        %v993 = vadd.f32 0.0, %v992
        %v994 = vpop.f32.mrb[0].mxu0
        %v995 = vpop.f32.mrb[0].mxu0
        %v996 = vpop.f32.mrb[0].mxu0
        %997 = vdwg.mxu0
        %v998 = vadd.f32 %v365, %v993
        %v999 = vld [vmem:[%s5] sm:$0x1]
        %v1001 = vlaneseq
        %v1002 = vshrl.u32 %v1001, 7
        %v1003 = vsub.s32 0, %v1002
        %v1004 = vrot.slane %v999, %v1003
        %v1006 = vadd.f32 %v998, %v1004
        %v1007 = vpack.c.bf16 %v1006, %v1006
        %vm1008 = vcmask 257024
        %1009 = vst.msk [vmem:[%s360] sm:$0xf] %vm1008, %v1007
        %s1010 = sand.u32 %s212, 1
        %s1011 = scalar_lea.sflag [#allocation4], %s1010
        %s1012 = sand.u32 %s212, 1
        %s1013 = smul.addr %s1012, 4
        %s1014 = scalar_lea.vmem [#allocation8], %s1013
        // Predicated region
        $region65: #{tpu_custom_call.1} parent=51 // pred_check
          %p1015 = pneg %p222
        $region66: #{tpu_custom_call.1} parent=51 // pred_check_branch
          %1017 = sbr.rel (%p1015) target = $region68
        $region67: #{tpu_custom_call.1} parent=51 // pred_region
          %s1019 = ssub.s32 64, 64
          %1020 = vsyncadd %s1011, %s1019
          %s1021 = smul.addr %s26, 64
          %s1022 = scalar_lea.hbm %s8, %s1021
          %s1024 = sshll.u32 %s1014, 4
          %s1025 = int_to_ptr.vmem [resolvable:$true] %s1024
          %1027 = dma.vmem_to_hbm [thread:$0]  %s1025, 64, %s1022, %s1011
        $region68: #{tpu_custom_call.1} parent=51 // pred_fallthru
          _
      $region52: #{tpu_custom_call.1} parent=5 // pred_fallthru
        _
      %p1028 = scmp.le.s32.totalorder 2, %s21
      // Predicated region
      $region69: #{tpu_custom_call.1} parent=5 // pred_check
        %p1029 = pneg %p1028
      $region70: #{tpu_custom_call.1} parent=5 // pred_check_branch
        %1031 = sbr.rel (%p1029) target = $region72
      $region71: #{tpu_custom_call.1} parent=5 // pred_region
        %s1032 = ssub.s32 %s21, 2
        // Predicated region
        $region73: #{tpu_custom_call.1} parent=71 // pred_check
          %p1033 = pneg %p228
        $region74: #{tpu_custom_call.1} parent=71 // pred_check_branch
          %1035 = sbr.rel (%p1033) target = $region76
        $region75: #{tpu_custom_call.1} parent=71 // pred_region
          %s1036 = sand.u32 %s213, 1
          %s1037 = scalar_lea.sflag [#allocation4], %s1036
          %s1038 = sand.u32 %s213, 1
          %s1039 = smul.addr %s1038, 4
          %s1040 = scalar_lea.vmem [#allocation8], %s1039
          %1041 = dma.done %s1037, 64
        $region76: #{tpu_custom_call.1} parent=71 // pred_fallthru
          _
      $region72: #{tpu_custom_call.1} parent=5 // pred_fallthru
        _
    $region6: #{tpu_custom_call.1} parent=1 // loop_footer
      %s25 = sadd.s32 1, %s21
    $region7: #{tpu_custom_call.1} parent=1 // loop_footer_branch
      %20 = sbr.rel target = $region3
    $region8: #{tpu_custom_call.1} parent=1 // loop_exit
      _
    %1042 = vsyncpa [#allocation3], 1
    %s1043 = scalar_lea.sflag [#allocation3], 1
    %1044 = vsyncpa %s1043, 1
    %1045 = vsyncpa [#allocation6], 1
    %1046 = vsyncpa [#allocation4], 1
    %s1047 = scalar_lea.sflag [#allocation4], 1
    %1048 = vsyncpa %s1047, 1

</llo_original>
